<compile_context>
chip_gen: v5e
topology: v5e:2x2
jax: 0.10.0
libtpu: 0.0.40
codegen_flags: <defaults>
</compile_context>

<pallas_src>
import jax
import jax.numpy as jnp
from jax.experimental import pallas as pl
from jax.experimental.pallas import tpu as pltpu


def decoder_kernel(x_ref, wih1_ref, whh1_ref, b1_ref,
                   w2_ref, b2_ref, wout_ref, bout_ref, out_ref):
    """Runs both LSTM layers (seq_len unrolled steps) + the output projection.

    x_ref    : (B, D)          -- the decoder feeds the SAME x at every timestep
    wih1_ref : (D, 4D)    whh1_ref : (D, 4D)    b1_ref : (1, 4D)
    w2_ref   : (D+H, 4H)  (fused [w_ih2.T ; w_hh2.T])   b2_ref : (1, 4H)
    wout_ref : (H, F)     bout_ref : (1, F)
    out_ref  : (T*B, F)   time-major rows: row t*B + b = (timestep t, batch b)
    """
    B, D = x_ref.shape
    DH, H4 = w2_ref.shape
    H = DH - D                       # hidden_dim = 2 * input_dim
    F = out_ref.shape[1]
    T = out_ref.shape[0] // B        # static seq_len

    x = x_ref[...]
    wih1 = wih1_ref[...]
    whh1 = whh1_ref[...]
    w2 = w2_ref[...]
    wout = wout_ref[...]

    # Hoisted bias broadcasts (done once, not once per timestep).
    b1b = jnp.broadcast_to(b1_ref[...], (B, 4 * D))
    b2b = jnp.broadcast_to(b2_ref[...], (B, H4))
    boutb = jnp.broadcast_to(bout_ref[...], (T * B, F))

    # Loop-invariant layer-1 input contribution.
    xg1 = jnp.dot(x, wih1, preferred_element_type=jnp.float32) + b1b  # (B, 4D)

    def sigmoid_t(v):
        # sigmoid(x) = 0.5 * tanh(0.5 * x) + 0.5  — one EUP op + VPU fma.
        return 0.5 * jnp.tanh(0.5 * v) + 0.5

    def lstm_cell(gates, c, n):
        # PyTorch gate order: i, f, g, o
        i = sigmoid_t(gates[:, 0 * n:1 * n])
        f = sigmoid_t(gates[:, 1 * n:2 * n])
        g = jnp.tanh(gates[:, 2 * n:3 * n])
        o = sigmoid_t(gates[:, 3 * n:4 * n])
        c_new = f * c + i * g
        h_new = o * jnp.tanh(c_new)
        return h_new, c_new

    h1 = jnp.zeros((B, D), jnp.float32)
    c1 = jnp.zeros((B, D), jnp.float32)
    h2 = jnp.zeros((B, H), jnp.float32)
    c2 = jnp.zeros((B, H), jnp.float32)

    # Static unroll of the recurrence (T is a compile-time constant).
    h2_steps = []
    for _ in range(T):
        # Layer 1 (hidden = D).
        g1 = xg1 + jnp.dot(h1, whh1, preferred_element_type=jnp.float32)
        h1, c1 = lstm_cell(g1, c1, D)
        # Layer 2 (hidden = H = 2D): single fused gate matmul.
        hh = jnp.concatenate([h1, h2], axis=1)                    # (B, D+H)
        g2 = jnp.dot(hh, w2, preferred_element_type=jnp.float32) + b2b
        h2, c2 = lstm_cell(g2, c2, H)
        h2_steps.append(h2)

    # Output projection hoisted out of the recurrence: one matmul + one store.
    h2_all = jnp.concatenate(h2_steps, axis=0)                    # (T*B, H)
    y = jnp.dot(h2_all, wout, preferred_element_type=jnp.float32) + boutb
    out_ref[...] = y.astype(out_ref.dtype)


def init_decoder_params(key, input_dim, n_features):
    """Deterministic parameter init with PyTorch-default uniform ranges."""
    D, H = input_dim, 2 * input_dim
    ks = jax.random.split(key, 10)

    def u(k, shape, fan):
        bound = 1.0 / jnp.sqrt(float(fan))
        return jax.random.uniform(k, shape, jnp.float32, -bound, bound)

    # rnn1: LSTM(D -> D)
    w_ih1 = u(ks[0], (4 * D, D), D)
    w_hh1 = u(ks[1], (4 * D, D), D)
    b_ih1 = u(ks[2], (4 * D,), D)
    b_hh1 = u(ks[3], (4 * D,), D)
    # rnn2: LSTM(D -> H)
    w_ih2 = u(ks[4], (4 * H, D), H)
    w_hh2 = u(ks[5], (4 * H, H), H)
    b_ih2 = u(ks[6], (4 * H,), H)
    b_hh2 = u(ks[7], (4 * H,), H)
    # output_layer: Linear(H -> n_features)
    w_out = u(ks[8], (n_features, H), H)
    b_out = u(ks[9], (n_features,), H)
    return (w_ih1, w_hh1, b_ih1, b_hh1,
            w_ih2, w_hh2, b_ih2, b_hh2,
            w_out, b_out)


def decoder_forward(x, params, seq_len, input_dim, n_features):
    """Equivalent of Decoder.forward: x -> (B, seq_len, n_features)."""
    (w_ih1, w_hh1, b_ih1, b_hh1,
     w_ih2, w_hh2, b_ih2, b_hh2,
     w_out, b_out) = params

    xb = x.reshape(-1, input_dim).astype(jnp.float32)   # x.reshape(-1, 1, D)
    B = xb.shape[0]
    D, H = input_dim, 2 * input_dim

    # Fused layer-2 weight: [h1, h2] @ W2 == h1 @ w_ih2.T + h2 @ w_hh2.T
    w2 = jnp.concatenate([w_ih2.T, w_hh2.T], axis=0)     # (D + H, 4H)

    args = (
        xb,
        w_ih1.T, w_hh1.T, (b_ih1 + b_hh1).reshape(1, -1),
        w2, (b_ih2 + b_hh2).reshape(1, -1),
        w_out.T, b_out.reshape(1, -1),
    )

    out_flat = pl.pallas_call(
        decoder_kernel,
        out_shape=jax.ShapeDtypeStruct((seq_len * B, n_features), jnp.float32),
        in_specs=[pl.BlockSpec(memory_space=pltpu.MemorySpace.VMEM)] * len(args),
        out_specs=pl.BlockSpec(memory_space=pltpu.MemorySpace.VMEM),
    )(*args)

    # time-major rows (T*B, F) -> (T, B, F) -> batch_first (B, T, F)
    return jnp.transpose(out_flat.reshape(seq_len, B, n_features), (1, 0, 2))


def decoder_forward_ref(x, params, seq_len, input_dim, n_features):
    """Pure-JAX reference (mirrors torch.nn.LSTM + Linear semantics)."""
    (w_ih1, w_hh1, b_ih1, b_hh1,
     w_ih2, w_hh2, b_ih2, b_hh2,
     w_out, b_out) = params
    D, H = input_dim, 2 * input_dim
    xb = x.reshape(-1, input_dim).astype(jnp.float32)
    B = xb.shape[0]

    def cell(xt, h, c, w_ih, w_hh, b_ih, b_hh, n):
        g = xt @ w_ih.T + h @ w_hh.T + b_ih + b_hh
        i = jax.nn.sigmoid(g[:, 0 * n:1 * n])
        f = jax.nn.sigmoid(g[:, 1 * n:2 * n])
        gg = jnp.tanh(g[:, 2 * n:3 * n])
        o = jax.nn.sigmoid(g[:, 3 * n:4 * n])
        c = f * c + i * gg
        h = o * jnp.tanh(c)
        return h, c

    h1 = c1 = jnp.zeros((B, D), jnp.float32)
    h2 = c2 = jnp.zeros((B, H), jnp.float32)
    outs = []
    for _ in range(seq_len):
        h1, c1 = cell(xb, h1, c1, w_ih1, w_hh1, b_ih1, b_hh1, D)
        h2, c2 = cell(h1, h2, c2, w_ih2, w_hh2, b_ih2, b_hh2, H)
        outs.append(h2 @ w_out.T + b_out)
    return jnp.stack(outs, axis=1)  # (B, T, F)


if __name__ == "__main__":
    seq_len = 8
    input_dim = 32
    n_features = 1
    batch = 2

    key = jax.random.PRNGKey(0)
    k_x, k_p = jax.random.split(key)
    # Decoder input: latent vector of size input_dim per example
    x = jax.random.normal(k_x, (batch, input_dim), jnp.float32)
    params = init_decoder_params(k_p, input_dim, n_features)

    out = decoder_forward(x, params, seq_len, input_dim, n_features)
    out = jax.block_until_ready(out)

    ref = decoder_forward_ref(x, params, seq_len, input_dim, n_features)
    assert out.shape == (batch, seq_len, n_features), out.shape
    assert jnp.allclose(out, ref, atol=1e-4, rtol=1e-4), \
        f"max err {jnp.max(jnp.abs(out - ref))}"

    print("KERNEL_OK")
</pallas_src>

<mosaic_0001>
module attributes {stable_mosaic.version = 11 : i64} {
  func.func @decoder_kernel(%arg0: memref<2x32xf32, #tpu.memory_space<vmem>>, %arg1: memref<32x128xf32, #tpu.memory_space<vmem>>, %arg2: memref<32x128xf32, #tpu.memory_space<vmem>>, %arg3: memref<1x128xf32, #tpu.memory_space<vmem>>, %arg4: memref<96x256xf32, #tpu.memory_space<vmem>>, %arg5: memref<1x256xf32, #tpu.memory_space<vmem>>, %arg6: memref<64x1xf32, #tpu.memory_space<vmem>>, %arg7: memref<1x1xf32, #tpu.memory_space<vmem>>, %arg8: memref<16x1xf32, #tpu.memory_space<vmem>>) attributes {dimension_semantics = [], scalar_prefetch = 0 : i64, scratch_operands = 0 : i64, tpu.core_type = #tpu.core_type<tc>} {
    %c0 = arith.constant 0 : index
    %c0_0 = arith.constant 0 : index
    %0 = vector.load %arg0[%c0, %c0_0] : memref<2x32xf32, #tpu.memory_space<vmem>>, vector<2x32xf32>
    %c0_1 = arith.constant 0 : index
    %c0_2 = arith.constant 0 : index
    %1 = vector.load %arg1[%c0_1, %c0_2] : memref<32x128xf32, #tpu.memory_space<vmem>>, vector<32x128xf32>
    %c0_3 = arith.constant 0 : index
    %c0_4 = arith.constant 0 : index
    %2 = vector.load %arg2[%c0_3, %c0_4] : memref<32x128xf32, #tpu.memory_space<vmem>>, vector<32x128xf32>
    %c0_5 = arith.constant 0 : index
    %c0_6 = arith.constant 0 : index
    %3 = vector.load %arg4[%c0_5, %c0_6] : memref<96x256xf32, #tpu.memory_space<vmem>>, vector<96x256xf32>
    %c0_7 = arith.constant 0 : index
    %c0_8 = arith.constant 0 : index
    %4 = vector.load %arg6[%c0_7, %c0_8] : memref<64x1xf32, #tpu.memory_space<vmem>>, vector<64x1xf32>
    %c0_9 = arith.constant 0 : index
    %c0_10 = arith.constant 0 : index
    %5 = vector.load %arg3[%c0_9, %c0_10] : memref<1x128xf32, #tpu.memory_space<vmem>>, vector<1x128xf32>
    %6 = vector.shape_cast %5 : vector<1x128xf32> to vector<1x128xf32>
    %7 = vector.broadcast %6 : vector<1x128xf32> to vector<2x128xf32>
    %c0_11 = arith.constant 0 : index
    %c0_12 = arith.constant 0 : index
    %8 = vector.load %arg5[%c0_11, %c0_12] : memref<1x256xf32, #tpu.memory_space<vmem>>, vector<1x256xf32>
    %9 = vector.shape_cast %8 : vector<1x256xf32> to vector<1x256xf32>
    %10 = vector.broadcast %9 : vector<1x256xf32> to vector<2x256xf32>
    %c0_13 = arith.constant 0 : index
    %c0_14 = arith.constant 0 : index
    %11 = vector.load %arg7[%c0_13, %c0_14] : memref<1x1xf32, #tpu.memory_space<vmem>>, vector<1x1xf32>
    %12 = vector.shape_cast %11 : vector<1x1xf32> to vector<1x1xf32>
    %13 = vector.broadcast %12 : vector<1x1xf32> to vector<16x1xf32>
    %cst = arith.constant dense<0.000000e+00> : vector<2x128xf32>
    %14 = tpu.matmul %0, %1, %cst {dimension_numbers = #tpu.dot_dimension_numbers<[1], [0], [0], [1], [0, 0, 1, 1], [], []>} : vector<2x32xf32>, vector<32x128xf32>, vector<2x128xf32> -> vector<2x128xf32>
    %15 = arith.addf %14, %7 : vector<2x128xf32>
    %cst_15 = arith.constant 0.000000e+00 : f32
    %16 = vector.broadcast %cst_15 : f32 to vector<2x32xf32>
    %cst_16 = arith.constant 0.000000e+00 : f32
    %17 = vector.broadcast %cst_16 : f32 to vector<2x32xf32>
    %cst_17 = arith.constant 0.000000e+00 : f32
    %18 = vector.broadcast %cst_17 : f32 to vector<2x64xf32>
    %cst_18 = arith.constant 0.000000e+00 : f32
    %19 = vector.broadcast %cst_18 : f32 to vector<2x64xf32>
    %cst_19 = arith.constant dense<0.000000e+00> : vector<2x128xf32>
    %20 = tpu.matmul %16, %2, %cst_19 {dimension_numbers = #tpu.dot_dimension_numbers<[1], [0], [0], [1], [0, 0, 1, 1], [], []>} : vector<2x32xf32>, vector<32x128xf32>, vector<2x128xf32> -> vector<2x128xf32>
    %21 = arith.addf %15, %20 : vector<2x128xf32>
    %22 = vector.extract_strided_slice %21 {offsets = [0, 0], sizes = [2, 32], strides = [1, 1]} : vector<2x128xf32> to vector<2x32xf32>
    %cst_20 = arith.constant 5.000000e-01 : f32
    %23 = vector.broadcast %cst_20 : f32 to vector<2x32xf32>
    %24 = arith.mulf %23, %22 : vector<2x32xf32>
    %25 = math.tanh %24 : vector<2x32xf32>
    %cst_21 = arith.constant 5.000000e-01 : f32
    %26 = vector.broadcast %cst_21 : f32 to vector<2x32xf32>
    %27 = arith.mulf %26, %25 : vector<2x32xf32>
    %cst_22 = arith.constant 5.000000e-01 : f32
    %28 = vector.broadcast %cst_22 : f32 to vector<2x32xf32>
    %29 = arith.addf %27, %28 : vector<2x32xf32>
    %30 = vector.extract_strided_slice %21 {offsets = [0, 32], sizes = [2, 32], strides = [1, 1]} : vector<2x128xf32> to vector<2x32xf32>
    %cst_23 = arith.constant 5.000000e-01 : f32
    %31 = vector.broadcast %cst_23 : f32 to vector<2x32xf32>
    %32 = arith.mulf %31, %30 : vector<2x32xf32>
    %33 = math.tanh %32 : vector<2x32xf32>
    %cst_24 = arith.constant 5.000000e-01 : f32
    %34 = vector.broadcast %cst_24 : f32 to vector<2x32xf32>
    %35 = arith.mulf %34, %33 : vector<2x32xf32>
    %cst_25 = arith.constant 5.000000e-01 : f32
    %36 = vector.broadcast %cst_25 : f32 to vector<2x32xf32>
    %37 = arith.addf %35, %36 : vector<2x32xf32>
    %38 = vector.extract_strided_slice %21 {offsets = [0, 64], sizes = [2, 32], strides = [1, 1]} : vector<2x128xf32> to vector<2x32xf32>
    %39 = math.tanh %38 : vector<2x32xf32>
    %40 = vector.extract_strided_slice %21 {offsets = [0, 96], sizes = [2, 32], strides = [1, 1]} : vector<2x128xf32> to vector<2x32xf32>
    %cst_26 = arith.constant 5.000000e-01 : f32
    %41 = vector.broadcast %cst_26 : f32 to vector<2x32xf32>
    %42 = arith.mulf %41, %40 : vector<2x32xf32>
    %43 = math.tanh %42 : vector<2x32xf32>
    %cst_27 = arith.constant 5.000000e-01 : f32
    %44 = vector.broadcast %cst_27 : f32 to vector<2x32xf32>
    %45 = arith.mulf %44, %43 : vector<2x32xf32>
    %cst_28 = arith.constant 5.000000e-01 : f32
    %46 = vector.broadcast %cst_28 : f32 to vector<2x32xf32>
    %47 = arith.addf %45, %46 : vector<2x32xf32>
    %48 = arith.mulf %37, %17 : vector<2x32xf32>
    %49 = arith.mulf %29, %39 : vector<2x32xf32>
    %50 = arith.addf %48, %49 : vector<2x32xf32>
    %51 = math.tanh %50 : vector<2x32xf32>
    %52 = arith.mulf %47, %51 : vector<2x32xf32>
    %53 = tpu.concatenate %52, %18 in 1 : vector<2x32xf32>, vector<2x64xf32> -> vector<2x96xf32>
    %cst_29 = arith.constant dense<0.000000e+00> : vector<2x256xf32>
    %54 = tpu.matmul %53, %3, %cst_29 {dimension_numbers = #tpu.dot_dimension_numbers<[1], [0], [0], [1], [0, 0, 1, 1], [], []>} : vector<2x96xf32>, vector<96x256xf32>, vector<2x256xf32> -> vector<2x256xf32>
    %55 = arith.addf %54, %10 : vector<2x256xf32>
    %56 = vector.extract_strided_slice %55 {offsets = [0, 0], sizes = [2, 64], strides = [1, 1]} : vector<2x256xf32> to vector<2x64xf32>
    %cst_30 = arith.constant 5.000000e-01 : f32
    %57 = vector.broadcast %cst_30 : f32 to vector<2x64xf32>
    %58 = arith.mulf %57, %56 : vector<2x64xf32>
    %59 = math.tanh %58 : vector<2x64xf32>
    %cst_31 = arith.constant 5.000000e-01 : f32
    %60 = vector.broadcast %cst_31 : f32 to vector<2x64xf32>
    %61 = arith.mulf %60, %59 : vector<2x64xf32>
    %cst_32 = arith.constant 5.000000e-01 : f32
    %62 = vector.broadcast %cst_32 : f32 to vector<2x64xf32>
    %63 = arith.addf %61, %62 : vector<2x64xf32>
    %64 = vector.extract_strided_slice %55 {offsets = [0, 64], sizes = [2, 64], strides = [1, 1]} : vector<2x256xf32> to vector<2x64xf32>
    %cst_33 = arith.constant 5.000000e-01 : f32
    %65 = vector.broadcast %cst_33 : f32 to vector<2x64xf32>
    %66 = arith.mulf %65, %64 : vector<2x64xf32>
    %67 = math.tanh %66 : vector<2x64xf32>
    %cst_34 = arith.constant 5.000000e-01 : f32
    %68 = vector.broadcast %cst_34 : f32 to vector<2x64xf32>
    %69 = arith.mulf %68, %67 : vector<2x64xf32>
    %cst_35 = arith.constant 5.000000e-01 : f32
    %70 = vector.broadcast %cst_35 : f32 to vector<2x64xf32>
    %71 = arith.addf %69, %70 : vector<2x64xf32>
    %72 = vector.extract_strided_slice %55 {offsets = [0, 128], sizes = [2, 64], strides = [1, 1]} : vector<2x256xf32> to vector<2x64xf32>
    %73 = math.tanh %72 : vector<2x64xf32>
    %74 = vector.extract_strided_slice %55 {offsets = [0, 192], sizes = [2, 64], strides = [1, 1]} : vector<2x256xf32> to vector<2x64xf32>
    %cst_36 = arith.constant 5.000000e-01 : f32
    %75 = vector.broadcast %cst_36 : f32 to vector<2x64xf32>
    %76 = arith.mulf %75, %74 : vector<2x64xf32>
    %77 = math.tanh %76 : vector<2x64xf32>
    %cst_37 = arith.constant 5.000000e-01 : f32
    %78 = vector.broadcast %cst_37 : f32 to vector<2x64xf32>
    %79 = arith.mulf %78, %77 : vector<2x64xf32>
    %cst_38 = arith.constant 5.000000e-01 : f32
    %80 = vector.broadcast %cst_38 : f32 to vector<2x64xf32>
    %81 = arith.addf %79, %80 : vector<2x64xf32>
    %82 = arith.mulf %71, %19 : vector<2x64xf32>
    %83 = arith.mulf %63, %73 : vector<2x64xf32>
    %84 = arith.addf %82, %83 : vector<2x64xf32>
    %85 = math.tanh %84 : vector<2x64xf32>
    %86 = arith.mulf %81, %85 : vector<2x64xf32>
    %cst_39 = arith.constant dense<0.000000e+00> : vector<2x128xf32>
    %87 = tpu.matmul %52, %2, %cst_39 {dimension_numbers = #tpu.dot_dimension_numbers<[1], [0], [0], [1], [0, 0, 1, 1], [], []>} : vector<2x32xf32>, vector<32x128xf32>, vector<2x128xf32> -> vector<2x128xf32>
    %88 = arith.addf %15, %87 : vector<2x128xf32>
    %89 = vector.extract_strided_slice %88 {offsets = [0, 0], sizes = [2, 32], strides = [1, 1]} : vector<2x128xf32> to vector<2x32xf32>
    %cst_40 = arith.constant 5.000000e-01 : f32
    %90 = vector.broadcast %cst_40 : f32 to vector<2x32xf32>
    %91 = arith.mulf %90, %89 : vector<2x32xf32>
    %92 = math.tanh %91 : vector<2x32xf32>
    %cst_41 = arith.constant 5.000000e-01 : f32
    %93 = vector.broadcast %cst_41 : f32 to vector<2x32xf32>
    %94 = arith.mulf %93, %92 : vector<2x32xf32>
    %cst_42 = arith.constant 5.000000e-01 : f32
    %95 = vector.broadcast %cst_42 : f32 to vector<2x32xf32>
    %96 = arith.addf %94, %95 : vector<2x32xf32>
    %97 = vector.extract_strided_slice %88 {offsets = [0, 32], sizes = [2, 32], strides = [1, 1]} : vector<2x128xf32> to vector<2x32xf32>
    %cst_43 = arith.constant 5.000000e-01 : f32
    %98 = vector.broadcast %cst_43 : f32 to vector<2x32xf32>
    %99 = arith.mulf %98, %97 : vector<2x32xf32>
    %100 = math.tanh %99 : vector<2x32xf32>
    %cst_44 = arith.constant 5.000000e-01 : f32
    %101 = vector.broadcast %cst_44 : f32 to vector<2x32xf32>
    %102 = arith.mulf %101, %100 : vector<2x32xf32>
    %cst_45 = arith.constant 5.000000e-01 : f32
    %103 = vector.broadcast %cst_45 : f32 to vector<2x32xf32>
    %104 = arith.addf %102, %103 : vector<2x32xf32>
    %105 = vector.extract_strided_slice %88 {offsets = [0, 64], sizes = [2, 32], strides = [1, 1]} : vector<2x128xf32> to vector<2x32xf32>
    %106 = math.tanh %105 : vector<2x32xf32>
    %107 = vector.extract_strided_slice %88 {offsets = [0, 96], sizes = [2, 32], strides = [1, 1]} : vector<2x128xf32> to vector<2x32xf32>
    %cst_46 = arith.constant 5.000000e-01 : f32
    %108 = vector.broadcast %cst_46 : f32 to vector<2x32xf32>
    %109 = arith.mulf %108, %107 : vector<2x32xf32>
    %110 = math.tanh %109 : vector<2x32xf32>
    %cst_47 = arith.constant 5.000000e-01 : f32
    %111 = vector.broadcast %cst_47 : f32 to vector<2x32xf32>
    %112 = arith.mulf %111, %110 : vector<2x32xf32>
    %cst_48 = arith.constant 5.000000e-01 : f32
    %113 = vector.broadcast %cst_48 : f32 to vector<2x32xf32>
    %114 = arith.addf %112, %113 : vector<2x32xf32>
    %115 = arith.mulf %104, %50 : vector<2x32xf32>
    %116 = arith.mulf %96, %106 : vector<2x32xf32>
    %117 = arith.addf %115, %116 : vector<2x32xf32>
    %118 = math.tanh %117 : vector<2x32xf32>
    %119 = arith.mulf %114, %118 : vector<2x32xf32>
    %120 = tpu.concatenate %119, %86 in 1 : vector<2x32xf32>, vector<2x64xf32> -> vector<2x96xf32>
    %cst_49 = arith.constant dense<0.000000e+00> : vector<2x256xf32>
    %121 = tpu.matmul %120, %3, %cst_49 {dimension_numbers = #tpu.dot_dimension_numbers<[1], [0], [0], [1], [0, 0, 1, 1], [], []>} : vector<2x96xf32>, vector<96x256xf32>, vector<2x256xf32> -> vector<2x256xf32>
    %122 = arith.addf %121, %10 : vector<2x256xf32>
    %123 = vector.extract_strided_slice %122 {offsets = [0, 0], sizes = [2, 64], strides = [1, 1]} : vector<2x256xf32> to vector<2x64xf32>
    %cst_50 = arith.constant 5.000000e-01 : f32
    %124 = vector.broadcast %cst_50 : f32 to vector<2x64xf32>
    %125 = arith.mulf %124, %123 : vector<2x64xf32>
    %126 = math.tanh %125 : vector<2x64xf32>
    %cst_51 = arith.constant 5.000000e-01 : f32
    %127 = vector.broadcast %cst_51 : f32 to vector<2x64xf32>
    %128 = arith.mulf %127, %126 : vector<2x64xf32>
    %cst_52 = arith.constant 5.000000e-01 : f32
    %129 = vector.broadcast %cst_52 : f32 to vector<2x64xf32>
    %130 = arith.addf %128, %129 : vector<2x64xf32>
    %131 = vector.extract_strided_slice %122 {offsets = [0, 64], sizes = [2, 64], strides = [1, 1]} : vector<2x256xf32> to vector<2x64xf32>
    %cst_53 = arith.constant 5.000000e-01 : f32
    %132 = vector.broadcast %cst_53 : f32 to vector<2x64xf32>
    %133 = arith.mulf %132, %131 : vector<2x64xf32>
    %134 = math.tanh %133 : vector<2x64xf32>
    %cst_54 = arith.constant 5.000000e-01 : f32
    %135 = vector.broadcast %cst_54 : f32 to vector<2x64xf32>
    %136 = arith.mulf %135, %134 : vector<2x64xf32>
    %cst_55 = arith.constant 5.000000e-01 : f32
    %137 = vector.broadcast %cst_55 : f32 to vector<2x64xf32>
    %138 = arith.addf %136, %137 : vector<2x64xf32>
    %139 = vector.extract_strided_slice %122 {offsets = [0, 128], sizes = [2, 64], strides = [1, 1]} : vector<2x256xf32> to vector<2x64xf32>
    %140 = math.tanh %139 : vector<2x64xf32>
    %141 = vector.extract_strided_slice %122 {offsets = [0, 192], sizes = [2, 64], strides = [1, 1]} : vector<2x256xf32> to vector<2x64xf32>
    %cst_56 = arith.constant 5.000000e-01 : f32
    %142 = vector.broadcast %cst_56 : f32 to vector<2x64xf32>
    %143 = arith.mulf %142, %141 : vector<2x64xf32>
    %144 = math.tanh %143 : vector<2x64xf32>
    %cst_57 = arith.constant 5.000000e-01 : f32
    %145 = vector.broadcast %cst_57 : f32 to vector<2x64xf32>
    %146 = arith.mulf %145, %144 : vector<2x64xf32>
    %cst_58 = arith.constant 5.000000e-01 : f32
    %147 = vector.broadcast %cst_58 : f32 to vector<2x64xf32>
    %148 = arith.addf %146, %147 : vector<2x64xf32>
    %149 = arith.mulf %138, %84 : vector<2x64xf32>
    %150 = arith.mulf %130, %140 : vector<2x64xf32>
    %151 = arith.addf %149, %150 : vector<2x64xf32>
    %152 = math.tanh %151 : vector<2x64xf32>
    %153 = arith.mulf %148, %152 : vector<2x64xf32>
    %cst_59 = arith.constant dense<0.000000e+00> : vector<2x128xf32>
    %154 = tpu.matmul %119, %2, %cst_59 {dimension_numbers = #tpu.dot_dimension_numbers<[1], [0], [0], [1], [0, 0, 1, 1], [], []>} : vector<2x32xf32>, vector<32x128xf32>, vector<2x128xf32> -> vector<2x128xf32>
    %155 = arith.addf %15, %154 : vector<2x128xf32>
    %156 = vector.extract_strided_slice %155 {offsets = [0, 0], sizes = [2, 32], strides = [1, 1]} : vector<2x128xf32> to vector<2x32xf32>
    %cst_60 = arith.constant 5.000000e-01 : f32
    %157 = vector.broadcast %cst_60 : f32 to vector<2x32xf32>
    %158 = arith.mulf %157, %156 : vector<2x32xf32>
    %159 = math.tanh %158 : vector<2x32xf32>
    %cst_61 = arith.constant 5.000000e-01 : f32
    %160 = vector.broadcast %cst_61 : f32 to vector<2x32xf32>
    %161 = arith.mulf %160, %159 : vector<2x32xf32>
    %cst_62 = arith.constant 5.000000e-01 : f32
    %162 = vector.broadcast %cst_62 : f32 to vector<2x32xf32>
    %163 = arith.addf %161, %162 : vector<2x32xf32>
    %164 = vector.extract_strided_slice %155 {offsets = [0, 32], sizes = [2, 32], strides = [1, 1]} : vector<2x128xf32> to vector<2x32xf32>
    %cst_63 = arith.constant 5.000000e-01 : f32
    %165 = vector.broadcast %cst_63 : f32 to vector<2x32xf32>
    %166 = arith.mulf %165, %164 : vector<2x32xf32>
    %167 = math.tanh %166 : vector<2x32xf32>
    %cst_64 = arith.constant 5.000000e-01 : f32
    %168 = vector.broadcast %cst_64 : f32 to vector<2x32xf32>
    %169 = arith.mulf %168, %167 : vector<2x32xf32>
    %cst_65 = arith.constant 5.000000e-01 : f32
    %170 = vector.broadcast %cst_65 : f32 to vector<2x32xf32>
    %171 = arith.addf %169, %170 : vector<2x32xf32>
    %172 = vector.extract_strided_slice %155 {offsets = [0, 64], sizes = [2, 32], strides = [1, 1]} : vector<2x128xf32> to vector<2x32xf32>
    %173 = math.tanh %172 : vector<2x32xf32>
    %174 = vector.extract_strided_slice %155 {offsets = [0, 96], sizes = [2, 32], strides = [1, 1]} : vector<2x128xf32> to vector<2x32xf32>
    %cst_66 = arith.constant 5.000000e-01 : f32
    %175 = vector.broadcast %cst_66 : f32 to vector<2x32xf32>
    %176 = arith.mulf %175, %174 : vector<2x32xf32>
    %177 = math.tanh %176 : vector<2x32xf32>
    %cst_67 = arith.constant 5.000000e-01 : f32
    %178 = vector.broadcast %cst_67 : f32 to vector<2x32xf32>
    %179 = arith.mulf %178, %177 : vector<2x32xf32>
    %cst_68 = arith.constant 5.000000e-01 : f32
    %180 = vector.broadcast %cst_68 : f32 to vector<2x32xf32>
    %181 = arith.addf %179, %180 : vector<2x32xf32>
    %182 = arith.mulf %171, %117 : vector<2x32xf32>
    %183 = arith.mulf %163, %173 : vector<2x32xf32>
    %184 = arith.addf %182, %183 : vector<2x32xf32>
    %185 = math.tanh %184 : vector<2x32xf32>
    %186 = arith.mulf %181, %185 : vector<2x32xf32>
    %187 = tpu.concatenate %186, %153 in 1 : vector<2x32xf32>, vector<2x64xf32> -> vector<2x96xf32>
    %cst_69 = arith.constant dense<0.000000e+00> : vector<2x256xf32>
    %188 = tpu.matmul %187, %3, %cst_69 {dimension_numbers = #tpu.dot_dimension_numbers<[1], [0], [0], [1], [0, 0, 1, 1], [], []>} : vector<2x96xf32>, vector<96x256xf32>, vector<2x256xf32> -> vector<2x256xf32>
    %189 = arith.addf %188, %10 : vector<2x256xf32>
    %190 = vector.extract_strided_slice %189 {offsets = [0, 0], sizes = [2, 64], strides = [1, 1]} : vector<2x256xf32> to vector<2x64xf32>
    %cst_70 = arith.constant 5.000000e-01 : f32
    %191 = vector.broadcast %cst_70 : f32 to vector<2x64xf32>
    %192 = arith.mulf %191, %190 : vector<2x64xf32>
    %193 = math.tanh %192 : vector<2x64xf32>
    %cst_71 = arith.constant 5.000000e-01 : f32
    %194 = vector.broadcast %cst_71 : f32 to vector<2x64xf32>
    %195 = arith.mulf %194, %193 : vector<2x64xf32>
    %cst_72 = arith.constant 5.000000e-01 : f32
    %196 = vector.broadcast %cst_72 : f32 to vector<2x64xf32>
    %197 = arith.addf %195, %196 : vector<2x64xf32>
    %198 = vector.extract_strided_slice %189 {offsets = [0, 64], sizes = [2, 64], strides = [1, 1]} : vector<2x256xf32> to vector<2x64xf32>
    %cst_73 = arith.constant 5.000000e-01 : f32
    %199 = vector.broadcast %cst_73 : f32 to vector<2x64xf32>
    %200 = arith.mulf %199, %198 : vector<2x64xf32>
    %201 = math.tanh %200 : vector<2x64xf32>
    %cst_74 = arith.constant 5.000000e-01 : f32
    %202 = vector.broadcast %cst_74 : f32 to vector<2x64xf32>
    %203 = arith.mulf %202, %201 : vector<2x64xf32>
    %cst_75 = arith.constant 5.000000e-01 : f32
    %204 = vector.broadcast %cst_75 : f32 to vector<2x64xf32>
    %205 = arith.addf %203, %204 : vector<2x64xf32>
    %206 = vector.extract_strided_slice %189 {offsets = [0, 128], sizes = [2, 64], strides = [1, 1]} : vector<2x256xf32> to vector<2x64xf32>
    %207 = math.tanh %206 : vector<2x64xf32>
    %208 = vector.extract_strided_slice %189 {offsets = [0, 192], sizes = [2, 64], strides = [1, 1]} : vector<2x256xf32> to vector<2x64xf32>
    %cst_76 = arith.constant 5.000000e-01 : f32
    %209 = vector.broadcast %cst_76 : f32 to vector<2x64xf32>
    %210 = arith.mulf %209, %208 : vector<2x64xf32>
    %211 = math.tanh %210 : vector<2x64xf32>
    %cst_77 = arith.constant 5.000000e-01 : f32
    %212 = vector.broadcast %cst_77 : f32 to vector<2x64xf32>
    %213 = arith.mulf %212, %211 : vector<2x64xf32>
    %cst_78 = arith.constant 5.000000e-01 : f32
    %214 = vector.broadcast %cst_78 : f32 to vector<2x64xf32>
    %215 = arith.addf %213, %214 : vector<2x64xf32>
    %216 = arith.mulf %205, %151 : vector<2x64xf32>
    %217 = arith.mulf %197, %207 : vector<2x64xf32>
    %218 = arith.addf %216, %217 : vector<2x64xf32>
    %219 = math.tanh %218 : vector<2x64xf32>
    %220 = arith.mulf %215, %219 : vector<2x64xf32>
    %cst_79 = arith.constant dense<0.000000e+00> : vector<2x128xf32>
    %221 = tpu.matmul %186, %2, %cst_79 {dimension_numbers = #tpu.dot_dimension_numbers<[1], [0], [0], [1], [0, 0, 1, 1], [], []>} : vector<2x32xf32>, vector<32x128xf32>, vector<2x128xf32> -> vector<2x128xf32>
    %222 = arith.addf %15, %221 : vector<2x128xf32>
    %223 = vector.extract_strided_slice %222 {offsets = [0, 0], sizes = [2, 32], strides = [1, 1]} : vector<2x128xf32> to vector<2x32xf32>
    %cst_80 = arith.constant 5.000000e-01 : f32
    %224 = vector.broadcast %cst_80 : f32 to vector<2x32xf32>
    %225 = arith.mulf %224, %223 : vector<2x32xf32>
    %226 = math.tanh %225 : vector<2x32xf32>
    %cst_81 = arith.constant 5.000000e-01 : f32
    %227 = vector.broadcast %cst_81 : f32 to vector<2x32xf32>
    %228 = arith.mulf %227, %226 : vector<2x32xf32>
    %cst_82 = arith.constant 5.000000e-01 : f32
    %229 = vector.broadcast %cst_82 : f32 to vector<2x32xf32>
    %230 = arith.addf %228, %229 : vector<2x32xf32>
    %231 = vector.extract_strided_slice %222 {offsets = [0, 32], sizes = [2, 32], strides = [1, 1]} : vector<2x128xf32> to vector<2x32xf32>
    %cst_83 = arith.constant 5.000000e-01 : f32
    %232 = vector.broadcast %cst_83 : f32 to vector<2x32xf32>
    %233 = arith.mulf %232, %231 : vector<2x32xf32>
    %234 = math.tanh %233 : vector<2x32xf32>
    %cst_84 = arith.constant 5.000000e-01 : f32
    %235 = vector.broadcast %cst_84 : f32 to vector<2x32xf32>
    %236 = arith.mulf %235, %234 : vector<2x32xf32>
    %cst_85 = arith.constant 5.000000e-01 : f32
    %237 = vector.broadcast %cst_85 : f32 to vector<2x32xf32>
    %238 = arith.addf %236, %237 : vector<2x32xf32>
    %239 = vector.extract_strided_slice %222 {offsets = [0, 64], sizes = [2, 32], strides = [1, 1]} : vector<2x128xf32> to vector<2x32xf32>
    %240 = math.tanh %239 : vector<2x32xf32>
    %241 = vector.extract_strided_slice %222 {offsets = [0, 96], sizes = [2, 32], strides = [1, 1]} : vector<2x128xf32> to vector<2x32xf32>
    %cst_86 = arith.constant 5.000000e-01 : f32
    %242 = vector.broadcast %cst_86 : f32 to vector<2x32xf32>
    %243 = arith.mulf %242, %241 : vector<2x32xf32>
    %244 = math.tanh %243 : vector<2x32xf32>
    %cst_87 = arith.constant 5.000000e-01 : f32
    %245 = vector.broadcast %cst_87 : f32 to vector<2x32xf32>
    %246 = arith.mulf %245, %244 : vector<2x32xf32>
    %cst_88 = arith.constant 5.000000e-01 : f32
    %247 = vector.broadcast %cst_88 : f32 to vector<2x32xf32>
    %248 = arith.addf %246, %247 : vector<2x32xf32>
    %249 = arith.mulf %238, %184 : vector<2x32xf32>
    %250 = arith.mulf %230, %240 : vector<2x32xf32>
    %251 = arith.addf %249, %250 : vector<2x32xf32>
    %252 = math.tanh %251 : vector<2x32xf32>
    %253 = arith.mulf %248, %252 : vector<2x32xf32>
    %254 = tpu.concatenate %253, %220 in 1 : vector<2x32xf32>, vector<2x64xf32> -> vector<2x96xf32>
    %cst_89 = arith.constant dense<0.000000e+00> : vector<2x256xf32>
    %255 = tpu.matmul %254, %3, %cst_89 {dimension_numbers = #tpu.dot_dimension_numbers<[1], [0], [0], [1], [0, 0, 1, 1], [], []>} : vector<2x96xf32>, vector<96x256xf32>, vector<2x256xf32> -> vector<2x256xf32>
    %256 = arith.addf %255, %10 : vector<2x256xf32>
    %257 = vector.extract_strided_slice %256 {offsets = [0, 0], sizes = [2, 64], strides = [1, 1]} : vector<2x256xf32> to vector<2x64xf32>
    %cst_90 = arith.constant 5.000000e-01 : f32
    %258 = vector.broadcast %cst_90 : f32 to vector<2x64xf32>
    %259 = arith.mulf %258, %257 : vector<2x64xf32>
    %260 = math.tanh %259 : vector<2x64xf32>
    %cst_91 = arith.constant 5.000000e-01 : f32
    %261 = vector.broadcast %cst_91 : f32 to vector<2x64xf32>
    %262 = arith.mulf %261, %260 : vector<2x64xf32>
    %cst_92 = arith.constant 5.000000e-01 : f32
    %263 = vector.broadcast %cst_92 : f32 to vector<2x64xf32>
    %264 = arith.addf %262, %263 : vector<2x64xf32>
    %265 = vector.extract_strided_slice %256 {offsets = [0, 64], sizes = [2, 64], strides = [1, 1]} : vector<2x256xf32> to vector<2x64xf32>
    %cst_93 = arith.constant 5.000000e-01 : f32
    %266 = vector.broadcast %cst_93 : f32 to vector<2x64xf32>
    %267 = arith.mulf %266, %265 : vector<2x64xf32>
    %268 = math.tanh %267 : vector<2x64xf32>
    %cst_94 = arith.constant 5.000000e-01 : f32
    %269 = vector.broadcast %cst_94 : f32 to vector<2x64xf32>
    %270 = arith.mulf %269, %268 : vector<2x64xf32>
    %cst_95 = arith.constant 5.000000e-01 : f32
    %271 = vector.broadcast %cst_95 : f32 to vector<2x64xf32>
    %272 = arith.addf %270, %271 : vector<2x64xf32>
    %273 = vector.extract_strided_slice %256 {offsets = [0, 128], sizes = [2, 64], strides = [1, 1]} : vector<2x256xf32> to vector<2x64xf32>
    %274 = math.tanh %273 : vector<2x64xf32>
    %275 = vector.extract_strided_slice %256 {offsets = [0, 192], sizes = [2, 64], strides = [1, 1]} : vector<2x256xf32> to vector<2x64xf32>
    %cst_96 = arith.constant 5.000000e-01 : f32
    %276 = vector.broadcast %cst_96 : f32 to vector<2x64xf32>
    %277 = arith.mulf %276, %275 : vector<2x64xf32>
    %278 = math.tanh %277 : vector<2x64xf32>
    %cst_97 = arith.constant 5.000000e-01 : f32
    %279 = vector.broadcast %cst_97 : f32 to vector<2x64xf32>
    %280 = arith.mulf %279, %278 : vector<2x64xf32>
    %cst_98 = arith.constant 5.000000e-01 : f32
    %281 = vector.broadcast %cst_98 : f32 to vector<2x64xf32>
    %282 = arith.addf %280, %281 : vector<2x64xf32>
    %283 = arith.mulf %272, %218 : vector<2x64xf32>
    %284 = arith.mulf %264, %274 : vector<2x64xf32>
    %285 = arith.addf %283, %284 : vector<2x64xf32>
    %286 = math.tanh %285 : vector<2x64xf32>
    %287 = arith.mulf %282, %286 : vector<2x64xf32>
    %cst_99 = arith.constant dense<0.000000e+00> : vector<2x128xf32>
    %288 = tpu.matmul %253, %2, %cst_99 {dimension_numbers = #tpu.dot_dimension_numbers<[1], [0], [0], [1], [0, 0, 1, 1], [], []>} : vector<2x32xf32>, vector<32x128xf32>, vector<2x128xf32> -> vector<2x128xf32>
    %289 = arith.addf %15, %288 : vector<2x128xf32>
    %290 = vector.extract_strided_slice %289 {offsets = [0, 0], sizes = [2, 32], strides = [1, 1]} : vector<2x128xf32> to vector<2x32xf32>
    %cst_100 = arith.constant 5.000000e-01 : f32
    %291 = vector.broadcast %cst_100 : f32 to vector<2x32xf32>
    %292 = arith.mulf %291, %290 : vector<2x32xf32>
    %293 = math.tanh %292 : vector<2x32xf32>
    %cst_101 = arith.constant 5.000000e-01 : f32
    %294 = vector.broadcast %cst_101 : f32 to vector<2x32xf32>
    %295 = arith.mulf %294, %293 : vector<2x32xf32>
    %cst_102 = arith.constant 5.000000e-01 : f32
    %296 = vector.broadcast %cst_102 : f32 to vector<2x32xf32>
    %297 = arith.addf %295, %296 : vector<2x32xf32>
    %298 = vector.extract_strided_slice %289 {offsets = [0, 32], sizes = [2, 32], strides = [1, 1]} : vector<2x128xf32> to vector<2x32xf32>
    %cst_103 = arith.constant 5.000000e-01 : f32
    %299 = vector.broadcast %cst_103 : f32 to vector<2x32xf32>
    %300 = arith.mulf %299, %298 : vector<2x32xf32>
    %301 = math.tanh %300 : vector<2x32xf32>
    %cst_104 = arith.constant 5.000000e-01 : f32
    %302 = vector.broadcast %cst_104 : f32 to vector<2x32xf32>
    %303 = arith.mulf %302, %301 : vector<2x32xf32>
    %cst_105 = arith.constant 5.000000e-01 : f32
    %304 = vector.broadcast %cst_105 : f32 to vector<2x32xf32>
    %305 = arith.addf %303, %304 : vector<2x32xf32>
    %306 = vector.extract_strided_slice %289 {offsets = [0, 64], sizes = [2, 32], strides = [1, 1]} : vector<2x128xf32> to vector<2x32xf32>
    %307 = math.tanh %306 : vector<2x32xf32>
    %308 = vector.extract_strided_slice %289 {offsets = [0, 96], sizes = [2, 32], strides = [1, 1]} : vector<2x128xf32> to vector<2x32xf32>
    %cst_106 = arith.constant 5.000000e-01 : f32
    %309 = vector.broadcast %cst_106 : f32 to vector<2x32xf32>
    %310 = arith.mulf %309, %308 : vector<2x32xf32>
    %311 = math.tanh %310 : vector<2x32xf32>
    %cst_107 = arith.constant 5.000000e-01 : f32
    %312 = vector.broadcast %cst_107 : f32 to vector<2x32xf32>
    %313 = arith.mulf %312, %311 : vector<2x32xf32>
    %cst_108 = arith.constant 5.000000e-01 : f32
    %314 = vector.broadcast %cst_108 : f32 to vector<2x32xf32>
    %315 = arith.addf %313, %314 : vector<2x32xf32>
    %316 = arith.mulf %305, %251 : vector<2x32xf32>
    %317 = arith.mulf %297, %307 : vector<2x32xf32>
    %318 = arith.addf %316, %317 : vector<2x32xf32>
    %319 = math.tanh %318 : vector<2x32xf32>
    %320 = arith.mulf %315, %319 : vector<2x32xf32>
    %321 = tpu.concatenate %320, %287 in 1 : vector<2x32xf32>, vector<2x64xf32> -> vector<2x96xf32>
    %cst_109 = arith.constant dense<0.000000e+00> : vector<2x256xf32>
    %322 = tpu.matmul %321, %3, %cst_109 {dimension_numbers = #tpu.dot_dimension_numbers<[1], [0], [0], [1], [0, 0, 1, 1], [], []>} : vector<2x96xf32>, vector<96x256xf32>, vector<2x256xf32> -> vector<2x256xf32>
    %323 = arith.addf %322, %10 : vector<2x256xf32>
    %324 = vector.extract_strided_slice %323 {offsets = [0, 0], sizes = [2, 64], strides = [1, 1]} : vector<2x256xf32> to vector<2x64xf32>
    %cst_110 = arith.constant 5.000000e-01 : f32
    %325 = vector.broadcast %cst_110 : f32 to vector<2x64xf32>
    %326 = arith.mulf %325, %324 : vector<2x64xf32>
    %327 = math.tanh %326 : vector<2x64xf32>
    %cst_111 = arith.constant 5.000000e-01 : f32
    %328 = vector.broadcast %cst_111 : f32 to vector<2x64xf32>
    %329 = arith.mulf %328, %327 : vector<2x64xf32>
    %cst_112 = arith.constant 5.000000e-01 : f32
    %330 = vector.broadcast %cst_112 : f32 to vector<2x64xf32>
    %331 = arith.addf %329, %330 : vector<2x64xf32>
    %332 = vector.extract_strided_slice %323 {offsets = [0, 64], sizes = [2, 64], strides = [1, 1]} : vector<2x256xf32> to vector<2x64xf32>
    %cst_113 = arith.constant 5.000000e-01 : f32
    %333 = vector.broadcast %cst_113 : f32 to vector<2x64xf32>
    %334 = arith.mulf %333, %332 : vector<2x64xf32>
    %335 = math.tanh %334 : vector<2x64xf32>
    %cst_114 = arith.constant 5.000000e-01 : f32
    %336 = vector.broadcast %cst_114 : f32 to vector<2x64xf32>
    %337 = arith.mulf %336, %335 : vector<2x64xf32>
    %cst_115 = arith.constant 5.000000e-01 : f32
    %338 = vector.broadcast %cst_115 : f32 to vector<2x64xf32>
    %339 = arith.addf %337, %338 : vector<2x64xf32>
    %340 = vector.extract_strided_slice %323 {offsets = [0, 128], sizes = [2, 64], strides = [1, 1]} : vector<2x256xf32> to vector<2x64xf32>
    %341 = math.tanh %340 : vector<2x64xf32>
    %342 = vector.extract_strided_slice %323 {offsets = [0, 192], sizes = [2, 64], strides = [1, 1]} : vector<2x256xf32> to vector<2x64xf32>
    %cst_116 = arith.constant 5.000000e-01 : f32
    %343 = vector.broadcast %cst_116 : f32 to vector<2x64xf32>
    %344 = arith.mulf %343, %342 : vector<2x64xf32>
    %345 = math.tanh %344 : vector<2x64xf32>
    %cst_117 = arith.constant 5.000000e-01 : f32
    %346 = vector.broadcast %cst_117 : f32 to vector<2x64xf32>
    %347 = arith.mulf %346, %345 : vector<2x64xf32>
    %cst_118 = arith.constant 5.000000e-01 : f32
    %348 = vector.broadcast %cst_118 : f32 to vector<2x64xf32>
    %349 = arith.addf %347, %348 : vector<2x64xf32>
    %350 = arith.mulf %339, %285 : vector<2x64xf32>
    %351 = arith.mulf %331, %341 : vector<2x64xf32>
    %352 = arith.addf %350, %351 : vector<2x64xf32>
    %353 = math.tanh %352 : vector<2x64xf32>
    %354 = arith.mulf %349, %353 : vector<2x64xf32>
    %cst_119 = arith.constant dense<0.000000e+00> : vector<2x128xf32>
    %355 = tpu.matmul %320, %2, %cst_119 {dimension_numbers = #tpu.dot_dimension_numbers<[1], [0], [0], [1], [0, 0, 1, 1], [], []>} : vector<2x32xf32>, vector<32x128xf32>, vector<2x128xf32> -> vector<2x128xf32>
    %356 = arith.addf %15, %355 : vector<2x128xf32>
    %357 = vector.extract_strided_slice %356 {offsets = [0, 0], sizes = [2, 32], strides = [1, 1]} : vector<2x128xf32> to vector<2x32xf32>
    %cst_120 = arith.constant 5.000000e-01 : f32
    %358 = vector.broadcast %cst_120 : f32 to vector<2x32xf32>
    %359 = arith.mulf %358, %357 : vector<2x32xf32>
    %360 = math.tanh %359 : vector<2x32xf32>
    %cst_121 = arith.constant 5.000000e-01 : f32
    %361 = vector.broadcast %cst_121 : f32 to vector<2x32xf32>
    %362 = arith.mulf %361, %360 : vector<2x32xf32>
    %cst_122 = arith.constant 5.000000e-01 : f32
    %363 = vector.broadcast %cst_122 : f32 to vector<2x32xf32>
    %364 = arith.addf %362, %363 : vector<2x32xf32>
    %365 = vector.extract_strided_slice %356 {offsets = [0, 32], sizes = [2, 32], strides = [1, 1]} : vector<2x128xf32> to vector<2x32xf32>
    %cst_123 = arith.constant 5.000000e-01 : f32
    %366 = vector.broadcast %cst_123 : f32 to vector<2x32xf32>
    %367 = arith.mulf %366, %365 : vector<2x32xf32>
    %368 = math.tanh %367 : vector<2x32xf32>
    %cst_124 = arith.constant 5.000000e-01 : f32
    %369 = vector.broadcast %cst_124 : f32 to vector<2x32xf32>
    %370 = arith.mulf %369, %368 : vector<2x32xf32>
    %cst_125 = arith.constant 5.000000e-01 : f32
    %371 = vector.broadcast %cst_125 : f32 to vector<2x32xf32>
    %372 = arith.addf %370, %371 : vector<2x32xf32>
    %373 = vector.extract_strided_slice %356 {offsets = [0, 64], sizes = [2, 32], strides = [1, 1]} : vector<2x128xf32> to vector<2x32xf32>
    %374 = math.tanh %373 : vector<2x32xf32>
    %375 = vector.extract_strided_slice %356 {offsets = [0, 96], sizes = [2, 32], strides = [1, 1]} : vector<2x128xf32> to vector<2x32xf32>
    %cst_126 = arith.constant 5.000000e-01 : f32
    %376 = vector.broadcast %cst_126 : f32 to vector<2x32xf32>
    %377 = arith.mulf %376, %375 : vector<2x32xf32>
    %378 = math.tanh %377 : vector<2x32xf32>
    %cst_127 = arith.constant 5.000000e-01 : f32
    %379 = vector.broadcast %cst_127 : f32 to vector<2x32xf32>
    %380 = arith.mulf %379, %378 : vector<2x32xf32>
    %cst_128 = arith.constant 5.000000e-01 : f32
    %381 = vector.broadcast %cst_128 : f32 to vector<2x32xf32>
    %382 = arith.addf %380, %381 : vector<2x32xf32>
    %383 = arith.mulf %372, %318 : vector<2x32xf32>
    %384 = arith.mulf %364, %374 : vector<2x32xf32>
    %385 = arith.addf %383, %384 : vector<2x32xf32>
    %386 = math.tanh %385 : vector<2x32xf32>
    %387 = arith.mulf %382, %386 : vector<2x32xf32>
    %388 = tpu.concatenate %387, %354 in 1 : vector<2x32xf32>, vector<2x64xf32> -> vector<2x96xf32>
    %cst_129 = arith.constant dense<0.000000e+00> : vector<2x256xf32>
    %389 = tpu.matmul %388, %3, %cst_129 {dimension_numbers = #tpu.dot_dimension_numbers<[1], [0], [0], [1], [0, 0, 1, 1], [], []>} : vector<2x96xf32>, vector<96x256xf32>, vector<2x256xf32> -> vector<2x256xf32>
    %390 = arith.addf %389, %10 : vector<2x256xf32>
    %391 = vector.extract_strided_slice %390 {offsets = [0, 0], sizes = [2, 64], strides = [1, 1]} : vector<2x256xf32> to vector<2x64xf32>
    %cst_130 = arith.constant 5.000000e-01 : f32
    %392 = vector.broadcast %cst_130 : f32 to vector<2x64xf32>
    %393 = arith.mulf %392, %391 : vector<2x64xf32>
    %394 = math.tanh %393 : vector<2x64xf32>
    %cst_131 = arith.constant 5.000000e-01 : f32
    %395 = vector.broadcast %cst_131 : f32 to vector<2x64xf32>
    %396 = arith.mulf %395, %394 : vector<2x64xf32>
    %cst_132 = arith.constant 5.000000e-01 : f32
    %397 = vector.broadcast %cst_132 : f32 to vector<2x64xf32>
    %398 = arith.addf %396, %397 : vector<2x64xf32>
    %399 = vector.extract_strided_slice %390 {offsets = [0, 64], sizes = [2, 64], strides = [1, 1]} : vector<2x256xf32> to vector<2x64xf32>
    %cst_133 = arith.constant 5.000000e-01 : f32
    %400 = vector.broadcast %cst_133 : f32 to vector<2x64xf32>
    %401 = arith.mulf %400, %399 : vector<2x64xf32>
    %402 = math.tanh %401 : vector<2x64xf32>
    %cst_134 = arith.constant 5.000000e-01 : f32
    %403 = vector.broadcast %cst_134 : f32 to vector<2x64xf32>
    %404 = arith.mulf %403, %402 : vector<2x64xf32>
    %cst_135 = arith.constant 5.000000e-01 : f32
    %405 = vector.broadcast %cst_135 : f32 to vector<2x64xf32>
    %406 = arith.addf %404, %405 : vector<2x64xf32>
    %407 = vector.extract_strided_slice %390 {offsets = [0, 128], sizes = [2, 64], strides = [1, 1]} : vector<2x256xf32> to vector<2x64xf32>
    %408 = math.tanh %407 : vector<2x64xf32>
    %409 = vector.extract_strided_slice %390 {offsets = [0, 192], sizes = [2, 64], strides = [1, 1]} : vector<2x256xf32> to vector<2x64xf32>
    %cst_136 = arith.constant 5.000000e-01 : f32
    %410 = vector.broadcast %cst_136 : f32 to vector<2x64xf32>
    %411 = arith.mulf %410, %409 : vector<2x64xf32>
    %412 = math.tanh %411 : vector<2x64xf32>
    %cst_137 = arith.constant 5.000000e-01 : f32
    %413 = vector.broadcast %cst_137 : f32 to vector<2x64xf32>
    %414 = arith.mulf %413, %412 : vector<2x64xf32>
    %cst_138 = arith.constant 5.000000e-01 : f32
    %415 = vector.broadcast %cst_138 : f32 to vector<2x64xf32>
    %416 = arith.addf %414, %415 : vector<2x64xf32>
    %417 = arith.mulf %406, %352 : vector<2x64xf32>
    %418 = arith.mulf %398, %408 : vector<2x64xf32>
    %419 = arith.addf %417, %418 : vector<2x64xf32>
    %420 = math.tanh %419 : vector<2x64xf32>
    %421 = arith.mulf %416, %420 : vector<2x64xf32>
    %cst_139 = arith.constant dense<0.000000e+00> : vector<2x128xf32>
    %422 = tpu.matmul %387, %2, %cst_139 {dimension_numbers = #tpu.dot_dimension_numbers<[1], [0], [0], [1], [0, 0, 1, 1], [], []>} : vector<2x32xf32>, vector<32x128xf32>, vector<2x128xf32> -> vector<2x128xf32>
    %423 = arith.addf %15, %422 : vector<2x128xf32>
    %424 = vector.extract_strided_slice %423 {offsets = [0, 0], sizes = [2, 32], strides = [1, 1]} : vector<2x128xf32> to vector<2x32xf32>
    %cst_140 = arith.constant 5.000000e-01 : f32
    %425 = vector.broadcast %cst_140 : f32 to vector<2x32xf32>
    %426 = arith.mulf %425, %424 : vector<2x32xf32>
    %427 = math.tanh %426 : vector<2x32xf32>
    %cst_141 = arith.constant 5.000000e-01 : f32
    %428 = vector.broadcast %cst_141 : f32 to vector<2x32xf32>
    %429 = arith.mulf %428, %427 : vector<2x32xf32>
    %cst_142 = arith.constant 5.000000e-01 : f32
    %430 = vector.broadcast %cst_142 : f32 to vector<2x32xf32>
    %431 = arith.addf %429, %430 : vector<2x32xf32>
    %432 = vector.extract_strided_slice %423 {offsets = [0, 32], sizes = [2, 32], strides = [1, 1]} : vector<2x128xf32> to vector<2x32xf32>
    %cst_143 = arith.constant 5.000000e-01 : f32
    %433 = vector.broadcast %cst_143 : f32 to vector<2x32xf32>
    %434 = arith.mulf %433, %432 : vector<2x32xf32>
    %435 = math.tanh %434 : vector<2x32xf32>
    %cst_144 = arith.constant 5.000000e-01 : f32
    %436 = vector.broadcast %cst_144 : f32 to vector<2x32xf32>
    %437 = arith.mulf %436, %435 : vector<2x32xf32>
    %cst_145 = arith.constant 5.000000e-01 : f32
    %438 = vector.broadcast %cst_145 : f32 to vector<2x32xf32>
    %439 = arith.addf %437, %438 : vector<2x32xf32>
    %440 = vector.extract_strided_slice %423 {offsets = [0, 64], sizes = [2, 32], strides = [1, 1]} : vector<2x128xf32> to vector<2x32xf32>
    %441 = math.tanh %440 : vector<2x32xf32>
    %442 = vector.extract_strided_slice %423 {offsets = [0, 96], sizes = [2, 32], strides = [1, 1]} : vector<2x128xf32> to vector<2x32xf32>
    %cst_146 = arith.constant 5.000000e-01 : f32
    %443 = vector.broadcast %cst_146 : f32 to vector<2x32xf32>
    %444 = arith.mulf %443, %442 : vector<2x32xf32>
    %445 = math.tanh %444 : vector<2x32xf32>
    %cst_147 = arith.constant 5.000000e-01 : f32
    %446 = vector.broadcast %cst_147 : f32 to vector<2x32xf32>
    %447 = arith.mulf %446, %445 : vector<2x32xf32>
    %cst_148 = arith.constant 5.000000e-01 : f32
    %448 = vector.broadcast %cst_148 : f32 to vector<2x32xf32>
    %449 = arith.addf %447, %448 : vector<2x32xf32>
    %450 = arith.mulf %439, %385 : vector<2x32xf32>
    %451 = arith.mulf %431, %441 : vector<2x32xf32>
    %452 = arith.addf %450, %451 : vector<2x32xf32>
    %453 = math.tanh %452 : vector<2x32xf32>
    %454 = arith.mulf %449, %453 : vector<2x32xf32>
    %455 = tpu.concatenate %454, %421 in 1 : vector<2x32xf32>, vector<2x64xf32> -> vector<2x96xf32>
    %cst_149 = arith.constant dense<0.000000e+00> : vector<2x256xf32>
    %456 = tpu.matmul %455, %3, %cst_149 {dimension_numbers = #tpu.dot_dimension_numbers<[1], [0], [0], [1], [0, 0, 1, 1], [], []>} : vector<2x96xf32>, vector<96x256xf32>, vector<2x256xf32> -> vector<2x256xf32>
    %457 = arith.addf %456, %10 : vector<2x256xf32>
    %458 = vector.extract_strided_slice %457 {offsets = [0, 0], sizes = [2, 64], strides = [1, 1]} : vector<2x256xf32> to vector<2x64xf32>
    %cst_150 = arith.constant 5.000000e-01 : f32
    %459 = vector.broadcast %cst_150 : f32 to vector<2x64xf32>
    %460 = arith.mulf %459, %458 : vector<2x64xf32>
    %461 = math.tanh %460 : vector<2x64xf32>
    %cst_151 = arith.constant 5.000000e-01 : f32
    %462 = vector.broadcast %cst_151 : f32 to vector<2x64xf32>
    %463 = arith.mulf %462, %461 : vector<2x64xf32>
    %cst_152 = arith.constant 5.000000e-01 : f32
    %464 = vector.broadcast %cst_152 : f32 to vector<2x64xf32>
    %465 = arith.addf %463, %464 : vector<2x64xf32>
    %466 = vector.extract_strided_slice %457 {offsets = [0, 64], sizes = [2, 64], strides = [1, 1]} : vector<2x256xf32> to vector<2x64xf32>
    %cst_153 = arith.constant 5.000000e-01 : f32
    %467 = vector.broadcast %cst_153 : f32 to vector<2x64xf32>
    %468 = arith.mulf %467, %466 : vector<2x64xf32>
    %469 = math.tanh %468 : vector<2x64xf32>
    %cst_154 = arith.constant 5.000000e-01 : f32
    %470 = vector.broadcast %cst_154 : f32 to vector<2x64xf32>
    %471 = arith.mulf %470, %469 : vector<2x64xf32>
    %cst_155 = arith.constant 5.000000e-01 : f32
    %472 = vector.broadcast %cst_155 : f32 to vector<2x64xf32>
    %473 = arith.addf %471, %472 : vector<2x64xf32>
    %474 = vector.extract_strided_slice %457 {offsets = [0, 128], sizes = [2, 64], strides = [1, 1]} : vector<2x256xf32> to vector<2x64xf32>
    %475 = math.tanh %474 : vector<2x64xf32>
    %476 = vector.extract_strided_slice %457 {offsets = [0, 192], sizes = [2, 64], strides = [1, 1]} : vector<2x256xf32> to vector<2x64xf32>
    %cst_156 = arith.constant 5.000000e-01 : f32
    %477 = vector.broadcast %cst_156 : f32 to vector<2x64xf32>
    %478 = arith.mulf %477, %476 : vector<2x64xf32>
    %479 = math.tanh %478 : vector<2x64xf32>
    %cst_157 = arith.constant 5.000000e-01 : f32
    %480 = vector.broadcast %cst_157 : f32 to vector<2x64xf32>
    %481 = arith.mulf %480, %479 : vector<2x64xf32>
    %cst_158 = arith.constant 5.000000e-01 : f32
    %482 = vector.broadcast %cst_158 : f32 to vector<2x64xf32>
    %483 = arith.addf %481, %482 : vector<2x64xf32>
    %484 = arith.mulf %473, %419 : vector<2x64xf32>
    %485 = arith.mulf %465, %475 : vector<2x64xf32>
    %486 = arith.addf %484, %485 : vector<2x64xf32>
    %487 = math.tanh %486 : vector<2x64xf32>
    %488 = arith.mulf %483, %487 : vector<2x64xf32>
    %cst_159 = arith.constant dense<0.000000e+00> : vector<2x128xf32>
    %489 = tpu.matmul %454, %2, %cst_159 {dimension_numbers = #tpu.dot_dimension_numbers<[1], [0], [0], [1], [0, 0, 1, 1], [], []>} : vector<2x32xf32>, vector<32x128xf32>, vector<2x128xf32> -> vector<2x128xf32>
    %490 = arith.addf %15, %489 : vector<2x128xf32>
    %491 = vector.extract_strided_slice %490 {offsets = [0, 0], sizes = [2, 32], strides = [1, 1]} : vector<2x128xf32> to vector<2x32xf32>
    %cst_160 = arith.constant 5.000000e-01 : f32
    %492 = vector.broadcast %cst_160 : f32 to vector<2x32xf32>
    %493 = arith.mulf %492, %491 : vector<2x32xf32>
    %494 = math.tanh %493 : vector<2x32xf32>
    %cst_161 = arith.constant 5.000000e-01 : f32
    %495 = vector.broadcast %cst_161 : f32 to vector<2x32xf32>
    %496 = arith.mulf %495, %494 : vector<2x32xf32>
    %cst_162 = arith.constant 5.000000e-01 : f32
    %497 = vector.broadcast %cst_162 : f32 to vector<2x32xf32>
    %498 = arith.addf %496, %497 : vector<2x32xf32>
    %499 = vector.extract_strided_slice %490 {offsets = [0, 32], sizes = [2, 32], strides = [1, 1]} : vector<2x128xf32> to vector<2x32xf32>
    %cst_163 = arith.constant 5.000000e-01 : f32
    %500 = vector.broadcast %cst_163 : f32 to vector<2x32xf32>
    %501 = arith.mulf %500, %499 : vector<2x32xf32>
    %502 = math.tanh %501 : vector<2x32xf32>
    %cst_164 = arith.constant 5.000000e-01 : f32
    %503 = vector.broadcast %cst_164 : f32 to vector<2x32xf32>
    %504 = arith.mulf %503, %502 : vector<2x32xf32>
    %cst_165 = arith.constant 5.000000e-01 : f32
    %505 = vector.broadcast %cst_165 : f32 to vector<2x32xf32>
    %506 = arith.addf %504, %505 : vector<2x32xf32>
    %507 = vector.extract_strided_slice %490 {offsets = [0, 64], sizes = [2, 32], strides = [1, 1]} : vector<2x128xf32> to vector<2x32xf32>
    %508 = math.tanh %507 : vector<2x32xf32>
    %509 = vector.extract_strided_slice %490 {offsets = [0, 96], sizes = [2, 32], strides = [1, 1]} : vector<2x128xf32> to vector<2x32xf32>
    %cst_166 = arith.constant 5.000000e-01 : f32
    %510 = vector.broadcast %cst_166 : f32 to vector<2x32xf32>
    %511 = arith.mulf %510, %509 : vector<2x32xf32>
    %512 = math.tanh %511 : vector<2x32xf32>
    %cst_167 = arith.constant 5.000000e-01 : f32
    %513 = vector.broadcast %cst_167 : f32 to vector<2x32xf32>
    %514 = arith.mulf %513, %512 : vector<2x32xf32>
    %cst_168 = arith.constant 5.000000e-01 : f32
    %515 = vector.broadcast %cst_168 : f32 to vector<2x32xf32>
    %516 = arith.addf %514, %515 : vector<2x32xf32>
    %517 = arith.mulf %506, %452 : vector<2x32xf32>
    %518 = arith.mulf %498, %508 : vector<2x32xf32>
    %519 = arith.addf %517, %518 : vector<2x32xf32>
    %520 = math.tanh %519 : vector<2x32xf32>
    %521 = arith.mulf %516, %520 : vector<2x32xf32>
    %522 = tpu.concatenate %521, %488 in 1 : vector<2x32xf32>, vector<2x64xf32> -> vector<2x96xf32>
    %cst_169 = arith.constant dense<0.000000e+00> : vector<2x256xf32>
    %523 = tpu.matmul %522, %3, %cst_169 {dimension_numbers = #tpu.dot_dimension_numbers<[1], [0], [0], [1], [0, 0, 1, 1], [], []>} : vector<2x96xf32>, vector<96x256xf32>, vector<2x256xf32> -> vector<2x256xf32>
    %524 = arith.addf %523, %10 : vector<2x256xf32>
    %525 = vector.extract_strided_slice %524 {offsets = [0, 0], sizes = [2, 64], strides = [1, 1]} : vector<2x256xf32> to vector<2x64xf32>
    %cst_170 = arith.constant 5.000000e-01 : f32
    %526 = vector.broadcast %cst_170 : f32 to vector<2x64xf32>
    %527 = arith.mulf %526, %525 : vector<2x64xf32>
    %528 = math.tanh %527 : vector<2x64xf32>
    %cst_171 = arith.constant 5.000000e-01 : f32
    %529 = vector.broadcast %cst_171 : f32 to vector<2x64xf32>
    %530 = arith.mulf %529, %528 : vector<2x64xf32>
    %cst_172 = arith.constant 5.000000e-01 : f32
    %531 = vector.broadcast %cst_172 : f32 to vector<2x64xf32>
    %532 = arith.addf %530, %531 : vector<2x64xf32>
    %533 = vector.extract_strided_slice %524 {offsets = [0, 64], sizes = [2, 64], strides = [1, 1]} : vector<2x256xf32> to vector<2x64xf32>
    %cst_173 = arith.constant 5.000000e-01 : f32
    %534 = vector.broadcast %cst_173 : f32 to vector<2x64xf32>
    %535 = arith.mulf %534, %533 : vector<2x64xf32>
    %536 = math.tanh %535 : vector<2x64xf32>
    %cst_174 = arith.constant 5.000000e-01 : f32
    %537 = vector.broadcast %cst_174 : f32 to vector<2x64xf32>
    %538 = arith.mulf %537, %536 : vector<2x64xf32>
    %cst_175 = arith.constant 5.000000e-01 : f32
    %539 = vector.broadcast %cst_175 : f32 to vector<2x64xf32>
    %540 = arith.addf %538, %539 : vector<2x64xf32>
    %541 = vector.extract_strided_slice %524 {offsets = [0, 128], sizes = [2, 64], strides = [1, 1]} : vector<2x256xf32> to vector<2x64xf32>
    %542 = math.tanh %541 : vector<2x64xf32>
    %543 = vector.extract_strided_slice %524 {offsets = [0, 192], sizes = [2, 64], strides = [1, 1]} : vector<2x256xf32> to vector<2x64xf32>
    %cst_176 = arith.constant 5.000000e-01 : f32
    %544 = vector.broadcast %cst_176 : f32 to vector<2x64xf32>
    %545 = arith.mulf %544, %543 : vector<2x64xf32>
    %546 = math.tanh %545 : vector<2x64xf32>
    %cst_177 = arith.constant 5.000000e-01 : f32
    %547 = vector.broadcast %cst_177 : f32 to vector<2x64xf32>
    %548 = arith.mulf %547, %546 : vector<2x64xf32>
    %cst_178 = arith.constant 5.000000e-01 : f32
    %549 = vector.broadcast %cst_178 : f32 to vector<2x64xf32>
    %550 = arith.addf %548, %549 : vector<2x64xf32>
    %551 = arith.mulf %540, %486 : vector<2x64xf32>
    %552 = arith.mulf %532, %542 : vector<2x64xf32>
    %553 = arith.addf %551, %552 : vector<2x64xf32>
    %554 = math.tanh %553 : vector<2x64xf32>
    %555 = arith.mulf %550, %554 : vector<2x64xf32>
    %556 = tpu.concatenate %86, %153, %220, %287, %354, %421, %488, %555 in 0 : vector<2x64xf32>, vector<2x64xf32>, vector<2x64xf32>, vector<2x64xf32>, vector<2x64xf32>, vector<2x64xf32>, vector<2x64xf32>, vector<2x64xf32> -> vector<16x64xf32>
    %cst_179 = arith.constant dense<0.000000e+00> : vector<16x1xf32>
    %557 = tpu.matmul %556, %4, %cst_179 {dimension_numbers = #tpu.dot_dimension_numbers<[1], [0], [0], [1], [0, 0, 1, 1], [], []>} : vector<16x64xf32>, vector<64x1xf32>, vector<16x1xf32> -> vector<16x1xf32>
    %558 = arith.addf %557, %13 : vector<16x1xf32>
    %c0_180 = arith.constant 0 : index
    %c0_181 = arith.constant 0 : index
    %559 = vector.load %arg8[%c0_180, %c0_181] : memref<16x1xf32, #tpu.memory_space<vmem>>, vector<16x1xf32>
    tpu.vector_store %arg8[%c0_180, %c0_181], %558 {strides = array<i32>} : memref<16x1xf32, #tpu.memory_space<vmem>>, vector<16x1xf32>,
    return
  }
}

</mosaic_0001>

<llo_original>
// kernel: tpu_custom_call.1
$region0: #{tpu_custom_call.1}
  #allocation0 [shape = 'u32[]', space=smem, size = 0x4, offset = 0x4, fixed_abs, tag = 'smem constant byte address 0x4 - core index']
  #allocation1 [shape = 'u32[72,128]{1,0:T(1,128)}', space=vmem, size = 0x9000, scoped, tag = 'internal scratch']
  #allocation2 [shape = 'f32[1,1]{1,0:T(1,128)S(1)}', space=vmem, size = 0x200, scoped, tag = 'scoped memory for tpu_custom_call.1']
  %s0 = inlined_call_operand.vmem [shape: f32[2,32], index: 0, kind: input, shape index: {}]
  %s1 = inlined_call_operand.vmem [shape: f32[32,128], index: 1, kind: input, shape index: {}]
  %s2 = inlined_call_operand.vmem [shape: f32[32,128], index: 2, kind: input, shape index: {}]
  %s3 = inlined_call_operand.hbm [shape: f32[1,128], index: 3, kind: input, shape index: {}]
  %s4 = inlined_call_operand.hbm [shape: f32[96,256], index: 4, kind: input, shape index: {}]
  %s5 = inlined_call_operand.vmem [shape: f32[1,256], index: 5, kind: input, shape index: {}]
  %s6 = inlined_call_operand.vmem [shape: f32[64,1], index: 6, kind: input, shape index: {}]
  %s7 = inlined_call_operand.<no memory space> [shape: f32[1,1], index: 7, kind: input, shape index: {}]
  %s8 = inlined_call_operand.vmem [shape: f32[16,1], index: 8, kind: output, shape index: {}]
  %s9 = sld [smem:[#allocation0]]
  $region50: #{tpu_custom_call.1} parent=0
    _
  %s11 = ssub.s32 1, %s9
  %s12 = scalar_select 0, %s11, %s9
  %v13 = vstv %s7
  %14 = vst [vmem:[#allocation2] sm:$0x1] %v13
  $region1: #{tpu_custom_call.1} parent=0
    #allocation3 [shape = 'u8[512]{0}', space=vmem, size = 0x400, scoped, tag = 'input window, operand 3, single buffered']
    #allocation4 [shape = 's32[1]{0}', space=sflag, size = 0x4, scoped, tag = 'scoped memory for tpu_custom_call.1']
    #allocation5 [shape = 'u8[98304]{0}', space=vmem, size = 0x18000, scoped, tag = 'input window, operand 4, single buffered']
    #allocation6 [shape = 's32[1]{0}', space=sflag, size = 0x4, scoped, tag = 'scoped memory for tpu_custom_call.1']
    %15 = vsyncpa [#allocation4], 0
    %16 = vsyncpa [#allocation6], 0
    // Predicated region
    $region2: #{tpu_custom_call.1} parent=1 // pred_check
      _
    $region3: #{tpu_custom_call.1} parent=1 // pred_check_branch
      %18 = sbr.rel (0) target = $region5
    $region4: #{tpu_custom_call.1} parent=1 // pred_region
      _
    $region5: #{tpu_custom_call.1} parent=1 // pred_fallthru
      _
    // Predicated region
    $region6: #{tpu_custom_call.1} parent=1 // pred_check
      _
    $region7: #{tpu_custom_call.1} parent=1 // pred_check_branch
      %20 = sbr.rel (0) target = $region9
    $region8: #{tpu_custom_call.1} parent=1 // pred_region
      _
    $region9: #{tpu_custom_call.1} parent=1 // pred_fallthru
      _
    // Predicated region
    $region10: #{tpu_custom_call.1} parent=1 // pred_check
      _
    $region11: #{tpu_custom_call.1} parent=1 // pred_check_branch
      %22 = sbr.rel (0) target = $region13
    $region12: #{tpu_custom_call.1} parent=1 // pred_region
      _
    $region13: #{tpu_custom_call.1} parent=1 // pred_fallthru
      _
    // Predicated region
    $region14: #{tpu_custom_call.1} parent=1 // pred_check
      _
    $region15: #{tpu_custom_call.1} parent=1 // pred_check_branch
      %24 = sbr.rel (0) target = $region17
    $region16: #{tpu_custom_call.1} parent=1 // pred_region
      %26 = vsyncadd [#allocation4], 0
      %s28 = sshll.u32 %s3, 4
      %s29 = int_to_ptr.hbm [resolvable:$true] %s28
      %s30 = sshll.u32 [#allocation3], 4
      %s31 = int_to_ptr.vmem [resolvable:$true] %s30
      %33 = dma.hbm_to_vmem [thread:$0]  %s29, 16, %s31, [#allocation4]
    $region17: #{tpu_custom_call.1} parent=1 // pred_fallthru
      _
    // Predicated region
    $region18: #{tpu_custom_call.1} parent=1 // pred_check
      _
    $region19: #{tpu_custom_call.1} parent=1 // pred_check_branch
      %35 = sbr.rel (0) target = $region21
    $region20: #{tpu_custom_call.1} parent=1 // pred_region
      %37 = vsyncadd [#allocation6], 0
      %s38 = sshll.u32 %s4, 4
      %s39 = int_to_ptr.hbm [resolvable:$true] %s38
      %s40 = sshll.u32 [#allocation5], 4
      %s41 = int_to_ptr.vmem [resolvable:$true] %s40
      %46 = dma.hbm_to_vmem [thread:$0]  %s39, 3072, %s41, [#allocation6], 256, 256, 16
    $region21: #{tpu_custom_call.1} parent=1 // pred_fallthru
      _
    // Predicated region
    $region22: #{tpu_custom_call.1} parent=1 // pred_check
      _
    $region23: #{tpu_custom_call.1} parent=1 // pred_check_branch
      %48 = sbr.rel (0) target = $region25
    $region24: #{tpu_custom_call.1} parent=1 // pred_region
      _
    $region25: #{tpu_custom_call.1} parent=1 // pred_fallthru
      _
    // Predicated region
    $region26: #{tpu_custom_call.1} parent=1 // pred_check
      _
    $region27: #{tpu_custom_call.1} parent=1 // pred_check_branch
      %50 = sbr.rel (0) target = $region29
    $region28: #{tpu_custom_call.1} parent=1 // pred_region
      _
    $region29: #{tpu_custom_call.1} parent=1 // pred_fallthru
      _
    // Predicated region
    $region30: #{tpu_custom_call.1} parent=1 // pred_check
      _
    $region31: #{tpu_custom_call.1} parent=1 // pred_check_branch
      %52 = sbr.rel (0) target = $region33
    $region32: #{tpu_custom_call.1} parent=1 // pred_region
      _
    $region33: #{tpu_custom_call.1} parent=1 // pred_fallthru
      _
    // Predicated region
    $region34: #{tpu_custom_call.1} parent=1 // pred_check
      _
    $region35: #{tpu_custom_call.1} parent=1 // pred_check_branch
      %54 = sbr.rel (0) target = $region37
    $region36: #{tpu_custom_call.1} parent=1 // pred_region
      %56 = dma.done [#allocation4], 16
    $region37: #{tpu_custom_call.1} parent=1 // pred_fallthru
      _
    // Predicated region
    $region38: #{tpu_custom_call.1} parent=1 // pred_check
      _
    $region39: #{tpu_custom_call.1} parent=1 // pred_check_branch
      %58 = sbr.rel (0) target = $region41
    $region40: #{tpu_custom_call.1} parent=1 // pred_region
      %60 = dma.done [#allocation6], 3072
    $region41: #{tpu_custom_call.1} parent=1 // pred_fallthru
      _
    %v61 = vld [vmem:[%s0] sm:$0x3]
    %v62 = vld [vmem:[%s1] sm:$0xff]
    %v63 = vld [vmem:[%s1 + $0x8] sm:$0xff]
    %v64 = vld [vmem:[%s1 + $0x10] sm:$0xff]
    %v65 = vld [vmem:[%s1 + $0x18] sm:$0xff]
    %v66 = vld [vmem:[%s2] sm:$0xff]
    %v67 = vld [vmem:[%s2 + $0x8] sm:$0xff]
    %v68 = vld [vmem:[%s2 + $0x10] sm:$0xff]
    %v69 = vld [vmem:[%s2 + $0x18] sm:$0xff]
    %v70 = vld [vmem:[#allocation5] sm:$0xff]
    %v71 = vld [vmem:[#allocation5 + $0x8] sm:$0xff]
    %v72 = vld [vmem:[#allocation5 + $0x10] sm:$0xff]
    %v73 = vld [vmem:[#allocation5 + $0x18] sm:$0xff]
    %v74 = vld [vmem:[#allocation5 + $0x20] sm:$0xff]
    %v75 = vld [vmem:[#allocation5 + $0x28] sm:$0xff]
    %v76 = vld [vmem:[#allocation5 + $0x30] sm:$0xff]
    %v77 = vld [vmem:[#allocation5 + $0x38] sm:$0xff]
    %v78 = vld [vmem:[#allocation5 + $0x40] sm:$0xff]
    %v79 = vld [vmem:[#allocation5 + $0x48] sm:$0xff]
    %v80 = vld [vmem:[#allocation5 + $0x50] sm:$0xff]
    %v81 = vld [vmem:[#allocation5 + $0x58] sm:$0xff]
    %v82 = vld [vmem:[#allocation5 + $0x60] sm:$0xff]
    %v83 = vld [vmem:[#allocation5 + $0x68] sm:$0xff]
    %v84 = vld [vmem:[#allocation5 + $0x70] sm:$0xff]
    %v85 = vld [vmem:[#allocation5 + $0x78] sm:$0xff]
    %v86 = vld [vmem:[#allocation5 + $0x80] sm:$0xff]
    %v87 = vld [vmem:[#allocation5 + $0x88] sm:$0xff]
    %v88 = vld [vmem:[#allocation5 + $0x90] sm:$0xff]
    %v89 = vld [vmem:[#allocation5 + $0x98] sm:$0xff]
    %v90 = vld [vmem:[#allocation5 + $0xa0] sm:$0xff]
    %v91 = vld [vmem:[#allocation5 + $0xa8] sm:$0xff]
    %v92 = vld [vmem:[#allocation5 + $0xb0] sm:$0xff]
    %v93 = vld [vmem:[#allocation5 + $0xb8] sm:$0xff]
    %v94 = vld [vmem:[%s6] sm:$0xff]
    %v95 = vld [vmem:[%s6 + $0x8] sm:$0xff]
    %v96 = vld [vmem:[%s6 + $0x10] sm:$0xff]
    %v97 = vld [vmem:[%s6 + $0x18] sm:$0xff]
    %v98 = vld [vmem:[%s6 + $0x20] sm:$0xff]
    %v99 = vld [vmem:[%s6 + $0x28] sm:$0xff]
    %v100 = vld [vmem:[%s6 + $0x30] sm:$0xff]
    %v101 = vld [vmem:[%s6 + $0x38] sm:$0xff]
    %v102 = vld [vmem:[#allocation3] sm:$0x1]
    %v104 = vperm.slane %v102, 0
    %v106 = vld [vmem:[%s5] sm:$0x3]
    %v108 = vperm.slane %v106, 0
    %v109 = vperm.slane %v106, 1
    %v112 = vld [vmem:[#allocation2] sm:$0x1]
    %v114 = vperm.slane %v112, 0
    %vm116 = vcmask 261120
    %v118 = vsel %vm116, %v61, 0
    %120 = vmatpush.msra.mxu0 0.0
    %121 = vmatpush.msra.mxu0 0.0
    %122 = vmatpush.msra.mxu0 0.0
    %123 = vmatpush.msra.mxu0 0.0
    %124 = vmatpush.msra.mxu0 0.0
    %125 = vmatpush.msra.mxu0 0.0
    %126 = vmatpush.msra.mxu0 0.0
    %127 = vmatpush.msra.mxu0 0.0
    %128 = vmatpush.msra.mxu0 0.0
    %129 = vmatpush.msra.mxu0 0.0
    %130 = vmatpush.msra.mxu0 0.0
    %131 = vmatpush.msra.mxu0 0.0
    %132 = vmatpush.msra.mxu0 %v65
    %133 = vmatpush.msra.mxu0 %v64
    %134 = vmatpush.msra.mxu0 %v63
    %135 = vmatpush.msra.mxu0 %v62
    %136 = vmatmul.f32.gmra.mxu0 %v118
    %v137 = vpop.f32.mrf.mxu0
    %v138 = vadd.f32 %v104, %v137
    %139 = vdwg.mxu0
    %v141 = vsel %vm116, 0.0, 0
    %143 = vmatpush.msra.mxu0 0.0
    %144 = vmatpush.msra.mxu0 0.0
    %145 = vmatpush.msra.mxu0 0.0
    %146 = vmatpush.msra.mxu0 0.0
    %147 = vmatpush.msra.mxu0 0.0
    %148 = vmatpush.msra.mxu0 0.0
    %149 = vmatpush.msra.mxu0 0.0
    %150 = vmatpush.msra.mxu0 0.0
    %151 = vmatpush.msra.mxu0 0.0
    %152 = vmatpush.msra.mxu0 0.0
    %153 = vmatpush.msra.mxu0 0.0
    %154 = vmatpush.msra.mxu0 0.0
    %155 = vmatpush.msra.mxu0 %v69
    %156 = vmatpush.msra.mxu0 %v68
    %157 = vmatpush.msra.mxu0 %v67
    %158 = vmatpush.msra.mxu0 %v66
    %159 = vmatmul.f32.gmra.mxu0 %v141
    %v160 = vpop.f32.mrf.mxu0
    %v161 = vadd.f32 0.0, %v160
    %162 = vdwg.mxu0
    %v163 = vadd.f32 %v138, %v161
    %v164 = vmul.f32 %v163, 0.5
    %v165 = vtanh.pop %v164
    %v166 = vmul.f32 %v165, 0.5
    %v167 = vadd.f32 %v166, 0.5
    %v168 = vtanh.pop %v163
    %v169 = vmul.f32 %v167, 0.0
    %171 = vrot.lane.b32.xlu0 %v168, 64
    %v172 = vpop.permute.xlu0 %171
    %v174 = vmul.f32 %v167, %v172
    %176 = vrot.lane.b32.xlu0 %v174, 32
    %v177 = vpop.permute.xlu0 %176
    %v179 = vadd.f32 %v169, %v177
    %v180 = vtanh.pop %v179
    %182 = vrot.lane.b32.xlu0 %v180, 64
    %v183 = vpop.permute.xlu0 %182
    %v185 = vmul.f32 %v167, %v183
    %187 = vrot.lane.b32.xlu0 %v185, 32
    %v188 = vpop.permute.xlu0 %187
    %v190 = vsel %vm116, %v188, 0.0
    %vm191 = vcmask 785408
    %v193 = vsel %vm191, %v190, 0
    %195 = vmatpush.msra.mxu0 0.0
    %196 = vmatpush.msra.mxu0 0.0
    %197 = vmatpush.msra.mxu0 0.0
    %198 = vmatpush.msra.mxu0 0.0
    %199 = vmatpush.msra.mxu0 %v92
    %200 = vmatpush.msra.mxu0 %v90
    %201 = vmatpush.msra.mxu0 %v88
    %202 = vmatpush.msra.mxu0 %v86
    %203 = vmatpush.msra.mxu0 %v84
    %204 = vmatpush.msra.mxu0 %v82
    %205 = vmatpush.msra.mxu0 %v80
    %206 = vmatpush.msra.mxu0 %v78
    %207 = vmatpush.msra.mxu0 %v76
    %208 = vmatpush.msra.mxu0 %v74
    %209 = vmatpush.msra.mxu0 %v72
    %210 = vmatpush.msra.mxu0 %v70
    %211 = vmatmul.f32.gmra.mxu0 %v193
    %v212 = vpop.f32.mrf.mxu0
    %v213 = vadd.f32 %v108, %v212
    %214 = vdwg.mxu0
    %215 = vmatpush.msra.mxu0 0.0
    %216 = vmatpush.msra.mxu0 0.0
    %217 = vmatpush.msra.mxu0 0.0
    %218 = vmatpush.msra.mxu0 0.0
    %219 = vmatpush.msra.mxu0 %v93
    %220 = vmatpush.msra.mxu0 %v91
    %221 = vmatpush.msra.mxu0 %v89
    %222 = vmatpush.msra.mxu0 %v87
    %223 = vmatpush.msra.mxu0 %v85
    %224 = vmatpush.msra.mxu0 %v83
    %225 = vmatpush.msra.mxu0 %v81
    %226 = vmatpush.msra.mxu0 %v79
    %227 = vmatpush.msra.mxu0 %v77
    %228 = vmatpush.msra.mxu0 %v75
    %229 = vmatpush.msra.mxu0 %v73
    %230 = vmatpush.msra.mxu0 %v71
    %231 = vmatmul.f32.gmra.mxu0 %v193
    %v232 = vpop.f32.mrf.mxu0
    %v233 = vadd.f32 %v109, %v232
    %234 = vdwg.mxu0
    %v235 = vmul.f32 %v213, 0.5
    %v236 = vtanh.pop %v235
    %v237 = vmul.f32 %v236, 0.5
    %v238 = vadd.f32 %v237, 0.5
    %v239 = vtanh.pop %v233
    %v240 = vmul.f32 %v233, 0.5
    %v241 = vtanh.pop %v240
    %v242 = vmul.f32 %v241, 0.5
    %v243 = vadd.f32 %v242, 0.5
    %v244 = vmul.f32 %v238, 0.0
    %v245 = vmul.f32 %v238, %v239
    %247 = vrot.lane.b32.xlu0 %v245, 64
    %v248 = vpop.permute.xlu0 %247
    %v250 = vadd.f32 %v244, %v248
    %v251 = vtanh.pop %v250
    %v252 = vmul.f32 %v243, %v251
    %v253 = vsel %vm116, %v188, 0
    %255 = vmatpush.msra.mxu0 0.0
    %256 = vmatpush.msra.mxu0 0.0
    %257 = vmatpush.msra.mxu0 0.0
    %258 = vmatpush.msra.mxu0 0.0
    %259 = vmatpush.msra.mxu0 0.0
    %260 = vmatpush.msra.mxu0 0.0
    %261 = vmatpush.msra.mxu0 0.0
    %262 = vmatpush.msra.mxu0 0.0
    %263 = vmatpush.msra.mxu0 0.0
    %264 = vmatpush.msra.mxu0 0.0
    %265 = vmatpush.msra.mxu0 0.0
    %266 = vmatpush.msra.mxu0 0.0
    %267 = vmatpush.msra.mxu0 %v69
    %268 = vmatpush.msra.mxu0 %v68
    %269 = vmatpush.msra.mxu0 %v67
    %270 = vmatpush.msra.mxu0 %v66
    %271 = vmatmul.f32.gmra.mxu0 %v253
    %v272 = vpop.f32.mrf.mxu0
    %v273 = vadd.f32 0.0, %v272
    %274 = vdwg.mxu0
    %v275 = vadd.f32 %v138, %v273
    %v276 = vmul.f32 %v275, 0.5
    %v277 = vtanh.pop %v276
    %v278 = vmul.f32 %v277, 0.5
    %v279 = vadd.f32 %v278, 0.5
    %v280 = vtanh.pop %v275
    %v281 = vmul.f32 %v279, %v179
    %283 = vrot.lane.b32.xlu0 %v280, 64
    %v284 = vpop.permute.xlu0 %283
    %v286 = vmul.f32 %v279, %v284
    %288 = vrot.lane.b32.xlu0 %v286, 32
    %v289 = vpop.permute.xlu0 %288
    %v291 = vadd.f32 %v281, %v289
    %v292 = vtanh.pop %v291
    %294 = vrot.lane.b32.xlu0 %v292, 64
    %v295 = vpop.permute.xlu0 %294
    %v297 = vmul.f32 %v279, %v295
    %299 = vrot.lane.b32.xlu0 %v297, 32
    %v300 = vpop.permute.xlu0 %299
    %303 = vrot.lane.b32.xlu0 %v252, 96
    %v304 = vpop.permute.xlu0 %303
    %v306 = vsel %vm116, %v300, %v304
    %v308 = vsel %vm191, %v306, 0
    %310 = vmatpush.msra.mxu0 0.0
    %311 = vmatpush.msra.mxu0 0.0
    %312 = vmatpush.msra.mxu0 0.0
    %313 = vmatpush.msra.mxu0 0.0
    %314 = vmatpush.msra.mxu0 %v92
    %315 = vmatpush.msra.mxu0 %v90
    %316 = vmatpush.msra.mxu0 %v88
    %317 = vmatpush.msra.mxu0 %v86
    %318 = vmatpush.msra.mxu0 %v84
    %319 = vmatpush.msra.mxu0 %v82
    %320 = vmatpush.msra.mxu0 %v80
    %321 = vmatpush.msra.mxu0 %v78
    %322 = vmatpush.msra.mxu0 %v76
    %323 = vmatpush.msra.mxu0 %v74
    %324 = vmatpush.msra.mxu0 %v72
    %325 = vmatpush.msra.mxu0 %v70
    %326 = vmatmul.f32.gmra.mxu0 %v308
    %v327 = vpop.f32.mrf.mxu0
    %v328 = vadd.f32 %v108, %v327
    %329 = vdwg.mxu0
    %330 = vmatpush.msra.mxu0 0.0
    %331 = vmatpush.msra.mxu0 0.0
    %332 = vmatpush.msra.mxu0 0.0
    %333 = vmatpush.msra.mxu0 0.0
    %334 = vmatpush.msra.mxu0 %v93
    %335 = vmatpush.msra.mxu0 %v91
    %336 = vmatpush.msra.mxu0 %v89
    %337 = vmatpush.msra.mxu0 %v87
    %338 = vmatpush.msra.mxu0 %v85
    %339 = vmatpush.msra.mxu0 %v83
    %340 = vmatpush.msra.mxu0 %v81
    %341 = vmatpush.msra.mxu0 %v79
    %342 = vmatpush.msra.mxu0 %v77
    %343 = vmatpush.msra.mxu0 %v75
    %344 = vmatpush.msra.mxu0 %v73
    %345 = vmatpush.msra.mxu0 %v71
    %346 = vmatmul.f32.gmra.mxu0 %v308
    %v347 = vpop.f32.mrf.mxu0
    %v348 = vadd.f32 %v109, %v347
    %349 = vdwg.mxu0
    %v350 = vmul.f32 %v328, 0.5
    %v351 = vtanh.pop %v350
    %v352 = vmul.f32 %v351, 0.5
    %v353 = vadd.f32 %v352, 0.5
    %v354 = vtanh.pop %v348
    %v355 = vmul.f32 %v348, 0.5
    %v356 = vtanh.pop %v355
    %v357 = vmul.f32 %v356, 0.5
    %v358 = vadd.f32 %v357, 0.5
    %v359 = vmul.f32 %v353, %v250
    %v360 = vmul.f32 %v353, %v354
    %362 = vrot.lane.b32.xlu0 %v360, 64
    %v363 = vpop.permute.xlu0 %362
    %v365 = vadd.f32 %v359, %v363
    %v366 = vtanh.pop %v365
    %v367 = vmul.f32 %v358, %v366
    %v368 = vsel %vm116, %v300, 0
    %370 = vmatpush.msra.mxu0 0.0
    %371 = vmatpush.msra.mxu0 0.0
    %372 = vmatpush.msra.mxu0 0.0
    %373 = vmatpush.msra.mxu0 0.0
    %374 = vmatpush.msra.mxu0 0.0
    %375 = vmatpush.msra.mxu0 0.0
    %376 = vmatpush.msra.mxu0 0.0
    %377 = vmatpush.msra.mxu0 0.0
    %378 = vmatpush.msra.mxu0 0.0
    %379 = vmatpush.msra.mxu0 0.0
    %380 = vmatpush.msra.mxu0 0.0
    %381 = vmatpush.msra.mxu0 0.0
    %382 = vmatpush.msra.mxu0 %v69
    %383 = vmatpush.msra.mxu0 %v68
    %384 = vmatpush.msra.mxu0 %v67
    %385 = vmatpush.msra.mxu0 %v66
    %386 = vmatmul.f32.gmra.mxu0 %v368
    %v387 = vpop.f32.mrf.mxu0
    %v388 = vadd.f32 0.0, %v387
    %389 = vdwg.mxu0
    %v390 = vadd.f32 %v138, %v388
    %v391 = vmul.f32 %v390, 0.5
    %v392 = vtanh.pop %v391
    %v393 = vmul.f32 %v392, 0.5
    %v394 = vadd.f32 %v393, 0.5
    %v395 = vtanh.pop %v390
    %v396 = vmul.f32 %v394, %v291
    %398 = vrot.lane.b32.xlu0 %v395, 64
    %v399 = vpop.permute.xlu0 %398
    %v401 = vmul.f32 %v394, %v399
    %403 = vrot.lane.b32.xlu0 %v401, 32
    %v404 = vpop.permute.xlu0 %403
    %v406 = vadd.f32 %v396, %v404
    %v407 = vtanh.pop %v406
    %409 = vrot.lane.b32.xlu0 %v407, 64
    %v410 = vpop.permute.xlu0 %409
    %v412 = vmul.f32 %v394, %v410
    %414 = vrot.lane.b32.xlu0 %v412, 32
    %v415 = vpop.permute.xlu0 %414
    %418 = vrot.lane.b32.xlu0 %v367, 96
    %v419 = vpop.permute.xlu0 %418
    %v421 = vsel %vm116, %v415, %v419
    %v423 = vsel %vm191, %v421, 0
    %425 = vmatpush.msra.mxu0 0.0
    %426 = vmatpush.msra.mxu0 0.0
    %427 = vmatpush.msra.mxu0 0.0
    %428 = vmatpush.msra.mxu0 0.0
    %429 = vmatpush.msra.mxu0 %v92
    %430 = vmatpush.msra.mxu0 %v90
    %431 = vmatpush.msra.mxu0 %v88
    %432 = vmatpush.msra.mxu0 %v86
    %433 = vmatpush.msra.mxu0 %v84
    %434 = vmatpush.msra.mxu0 %v82
    %435 = vmatpush.msra.mxu0 %v80
    %436 = vmatpush.msra.mxu0 %v78
    %437 = vmatpush.msra.mxu0 %v76
    %438 = vmatpush.msra.mxu0 %v74
    %439 = vmatpush.msra.mxu0 %v72
    %440 = vmatpush.msra.mxu0 %v70
    %441 = vmatmul.f32.gmra.mxu0 %v423
    %v442 = vpop.f32.mrf.mxu0
    %v443 = vadd.f32 %v108, %v442
    %444 = vdwg.mxu0
    %445 = vmatpush.msra.mxu0 0.0
    %446 = vmatpush.msra.mxu0 0.0
    %447 = vmatpush.msra.mxu0 0.0
    %448 = vmatpush.msra.mxu0 0.0
    %449 = vmatpush.msra.mxu0 %v93
    %450 = vmatpush.msra.mxu0 %v91
    %451 = vmatpush.msra.mxu0 %v89
    %452 = vmatpush.msra.mxu0 %v87
    %453 = vmatpush.msra.mxu0 %v85
    %454 = vmatpush.msra.mxu0 %v83
    %455 = vmatpush.msra.mxu0 %v81
    %456 = vmatpush.msra.mxu0 %v79
    %457 = vmatpush.msra.mxu0 %v77
    %458 = vmatpush.msra.mxu0 %v75
    %459 = vmatpush.msra.mxu0 %v73
    %460 = vmatpush.msra.mxu0 %v71
    %461 = vmatmul.f32.gmra.mxu0 %v423
    %v462 = vpop.f32.mrf.mxu0
    %v463 = vadd.f32 %v109, %v462
    %464 = vdwg.mxu0
    %v465 = vmul.f32 %v443, 0.5
    %v466 = vtanh.pop %v465
    %v467 = vmul.f32 %v466, 0.5
    %v468 = vadd.f32 %v467, 0.5
    %v469 = vtanh.pop %v463
    %v470 = vmul.f32 %v463, 0.5
    %v471 = vtanh.pop %v470
    %v472 = vmul.f32 %v471, 0.5
    %v473 = vadd.f32 %v472, 0.5
    %v474 = vmul.f32 %v468, %v365
    %v475 = vmul.f32 %v468, %v469
    %477 = vrot.lane.b32.xlu0 %v475, 64
    %v478 = vpop.permute.xlu0 %477
    %v480 = vadd.f32 %v474, %v478
    %v481 = vtanh.pop %v480
    %v482 = vmul.f32 %v473, %v481
    %v483 = vsel %vm116, %v415, 0
    %485 = vmatpush.msra.mxu0 0.0
    %486 = vmatpush.msra.mxu0 0.0
    %487 = vmatpush.msra.mxu0 0.0
    %488 = vmatpush.msra.mxu0 0.0
    %489 = vmatpush.msra.mxu0 0.0
    %490 = vmatpush.msra.mxu0 0.0
    %491 = vmatpush.msra.mxu0 0.0
    %492 = vmatpush.msra.mxu0 0.0
    %493 = vmatpush.msra.mxu0 0.0
    %494 = vmatpush.msra.mxu0 0.0
    %495 = vmatpush.msra.mxu0 0.0
    %496 = vmatpush.msra.mxu0 0.0
    %497 = vmatpush.msra.mxu0 %v69
    %498 = vmatpush.msra.mxu0 %v68
    %499 = vmatpush.msra.mxu0 %v67
    %500 = vmatpush.msra.mxu0 %v66
    %501 = vmatmul.f32.gmra.mxu0 %v483
    %v502 = vpop.f32.mrf.mxu0
    %v503 = vadd.f32 0.0, %v502
    %504 = vdwg.mxu0
    %v505 = vadd.f32 %v138, %v503
    %v506 = vmul.f32 %v505, 0.5
    %v507 = vtanh.pop %v506
    %v508 = vmul.f32 %v507, 0.5
    %v509 = vadd.f32 %v508, 0.5
    %v510 = vtanh.pop %v505
    %v511 = vmul.f32 %v509, %v406
    %513 = vrot.lane.b32.xlu0 %v510, 64
    %v514 = vpop.permute.xlu0 %513
    %v516 = vmul.f32 %v509, %v514
    %518 = vrot.lane.b32.xlu0 %v516, 32
    %v519 = vpop.permute.xlu0 %518
    %v521 = vadd.f32 %v511, %v519
    %v522 = vtanh.pop %v521
    %524 = vrot.lane.b32.xlu0 %v522, 64
    %v525 = vpop.permute.xlu0 %524
    %v527 = vmul.f32 %v509, %v525
    %529 = vrot.lane.b32.xlu0 %v527, 32
    %v530 = vpop.permute.xlu0 %529
    %533 = vrot.lane.b32.xlu0 %v482, 96
    %v534 = vpop.permute.xlu0 %533
    %v536 = vsel %vm116, %v530, %v534
    %v538 = vsel %vm191, %v536, 0
    %540 = vmatpush.msra.mxu0 0.0
    %541 = vmatpush.msra.mxu0 0.0
    %542 = vmatpush.msra.mxu0 0.0
    %543 = vmatpush.msra.mxu0 0.0
    %544 = vmatpush.msra.mxu0 %v92
    %545 = vmatpush.msra.mxu0 %v90
    %546 = vmatpush.msra.mxu0 %v88
    %547 = vmatpush.msra.mxu0 %v86
    %548 = vmatpush.msra.mxu0 %v84
    %549 = vmatpush.msra.mxu0 %v82
    %550 = vmatpush.msra.mxu0 %v80
    %551 = vmatpush.msra.mxu0 %v78
    %552 = vmatpush.msra.mxu0 %v76
    %553 = vmatpush.msra.mxu0 %v74
    %554 = vmatpush.msra.mxu0 %v72
    %555 = vmatpush.msra.mxu0 %v70
    %556 = vmatmul.f32.gmra.mxu0 %v538
    %v557 = vpop.f32.mrf.mxu0
    %v558 = vadd.f32 %v108, %v557
    %559 = vdwg.mxu0
    %560 = vmatpush.msra.mxu0 0.0
    %561 = vmatpush.msra.mxu0 0.0
    %562 = vmatpush.msra.mxu0 0.0
    %563 = vmatpush.msra.mxu0 0.0
    %564 = vmatpush.msra.mxu0 %v93
    %565 = vmatpush.msra.mxu0 %v91
    %566 = vmatpush.msra.mxu0 %v89
    %567 = vmatpush.msra.mxu0 %v87
    %568 = vmatpush.msra.mxu0 %v85
    %569 = vmatpush.msra.mxu0 %v83
    %570 = vmatpush.msra.mxu0 %v81
    %571 = vmatpush.msra.mxu0 %v79
    %572 = vmatpush.msra.mxu0 %v77
    %573 = vmatpush.msra.mxu0 %v75
    %574 = vmatpush.msra.mxu0 %v73
    %575 = vmatpush.msra.mxu0 %v71
    %576 = vmatmul.f32.gmra.mxu0 %v538
    %v577 = vpop.f32.mrf.mxu0
    %v578 = vadd.f32 %v109, %v577
    %579 = vdwg.mxu0
    %v580 = vmul.f32 %v558, 0.5
    %v581 = vtanh.pop %v580
    %v582 = vmul.f32 %v581, 0.5
    %v583 = vadd.f32 %v582, 0.5
    %v584 = vtanh.pop %v578
    %v585 = vmul.f32 %v578, 0.5
    %v586 = vtanh.pop %v585
    %v587 = vmul.f32 %v586, 0.5
    %v588 = vadd.f32 %v587, 0.5
    %v589 = vmul.f32 %v583, %v480
    %v590 = vmul.f32 %v583, %v584
    %592 = vrot.lane.b32.xlu0 %v590, 64
    %v593 = vpop.permute.xlu0 %592
    %v595 = vadd.f32 %v589, %v593
    %v596 = vtanh.pop %v595
    %v597 = vmul.f32 %v588, %v596
    %v598 = vsel %vm116, %v530, 0
    %600 = vmatpush.msra.mxu0 0.0
    %601 = vmatpush.msra.mxu0 0.0
    %602 = vmatpush.msra.mxu0 0.0
    %603 = vmatpush.msra.mxu0 0.0
    %604 = vmatpush.msra.mxu0 0.0
    %605 = vmatpush.msra.mxu0 0.0
    %606 = vmatpush.msra.mxu0 0.0
    %607 = vmatpush.msra.mxu0 0.0
    %608 = vmatpush.msra.mxu0 0.0
    %609 = vmatpush.msra.mxu0 0.0
    %610 = vmatpush.msra.mxu0 0.0
    %611 = vmatpush.msra.mxu0 0.0
    %612 = vmatpush.msra.mxu0 %v69
    %613 = vmatpush.msra.mxu0 %v68
    %614 = vmatpush.msra.mxu0 %v67
    %615 = vmatpush.msra.mxu0 %v66
    %616 = vmatmul.f32.gmra.mxu0 %v598
    %v617 = vpop.f32.mrf.mxu0
    %v618 = vadd.f32 0.0, %v617
    %619 = vdwg.mxu0
    %v620 = vadd.f32 %v138, %v618
    %v621 = vmul.f32 %v620, 0.5
    %v622 = vtanh.pop %v621
    %v623 = vmul.f32 %v622, 0.5
    %v624 = vadd.f32 %v623, 0.5
    %v625 = vtanh.pop %v620
    %v626 = vmul.f32 %v624, %v521
    %628 = vrot.lane.b32.xlu0 %v625, 64
    %v629 = vpop.permute.xlu0 %628
    %v631 = vmul.f32 %v624, %v629
    %633 = vrot.lane.b32.xlu0 %v631, 32
    %v634 = vpop.permute.xlu0 %633
    %v636 = vadd.f32 %v626, %v634
    %v637 = vtanh.pop %v636
    %639 = vrot.lane.b32.xlu0 %v637, 64
    %v640 = vpop.permute.xlu0 %639
    %v642 = vmul.f32 %v624, %v640
    %644 = vrot.lane.b32.xlu0 %v642, 32
    %v645 = vpop.permute.xlu0 %644
    %648 = vrot.lane.b32.xlu0 %v597, 96
    %v649 = vpop.permute.xlu0 %648
    %v651 = vsel %vm116, %v645, %v649
    %v653 = vsel %vm191, %v651, 0
    %655 = vmatpush.msra.mxu0 0.0
    %656 = vmatpush.msra.mxu0 0.0
    %657 = vmatpush.msra.mxu0 0.0
    %658 = vmatpush.msra.mxu0 0.0
    %659 = vmatpush.msra.mxu0 %v92
    %660 = vmatpush.msra.mxu0 %v90
    %661 = vmatpush.msra.mxu0 %v88
    %662 = vmatpush.msra.mxu0 %v86
    %663 = vmatpush.msra.mxu0 %v84
    %664 = vmatpush.msra.mxu0 %v82
    %665 = vmatpush.msra.mxu0 %v80
    %666 = vmatpush.msra.mxu0 %v78
    %667 = vmatpush.msra.mxu0 %v76
    %668 = vmatpush.msra.mxu0 %v74
    %669 = vmatpush.msra.mxu0 %v72
    %670 = vmatpush.msra.mxu0 %v70
    %671 = vmatmul.f32.gmra.mxu0 %v653
    %v672 = vpop.f32.mrf.mxu0
    %v673 = vadd.f32 %v108, %v672
    %674 = vdwg.mxu0
    %675 = vmatpush.msra.mxu0 0.0
    %676 = vmatpush.msra.mxu0 0.0
    %677 = vmatpush.msra.mxu0 0.0
    %678 = vmatpush.msra.mxu0 0.0
    %679 = vmatpush.msra.mxu0 %v93
    %680 = vmatpush.msra.mxu0 %v91
    %681 = vmatpush.msra.mxu0 %v89
    %682 = vmatpush.msra.mxu0 %v87
    %683 = vmatpush.msra.mxu0 %v85
    %684 = vmatpush.msra.mxu0 %v83
    %685 = vmatpush.msra.mxu0 %v81
    %686 = vmatpush.msra.mxu0 %v79
    %687 = vmatpush.msra.mxu0 %v77
    %688 = vmatpush.msra.mxu0 %v75
    %689 = vmatpush.msra.mxu0 %v73
    %690 = vmatpush.msra.mxu0 %v71
    %691 = vmatmul.f32.gmra.mxu0 %v653
    %v692 = vpop.f32.mrf.mxu0
    %v693 = vadd.f32 %v109, %v692
    %694 = vdwg.mxu0
    %v695 = vmul.f32 %v673, 0.5
    %v696 = vtanh.pop %v695
    %v697 = vmul.f32 %v696, 0.5
    %v698 = vadd.f32 %v697, 0.5
    %v699 = vtanh.pop %v693
    %v700 = vmul.f32 %v693, 0.5
    %v701 = vtanh.pop %v700
    %v702 = vmul.f32 %v701, 0.5
    %v703 = vadd.f32 %v702, 0.5
    %v704 = vmul.f32 %v698, %v595
    %v705 = vmul.f32 %v698, %v699
    %707 = vrot.lane.b32.xlu0 %v705, 64
    %v708 = vpop.permute.xlu0 %707
    %v710 = vadd.f32 %v704, %v708
    %v711 = vtanh.pop %v710
    %v712 = vmul.f32 %v703, %v711
    %v713 = vsel %vm116, %v645, 0
    %715 = vmatpush.msra.mxu0 0.0
    %716 = vmatpush.msra.mxu0 0.0
    %717 = vmatpush.msra.mxu0 0.0
    %718 = vmatpush.msra.mxu0 0.0
    %719 = vmatpush.msra.mxu0 0.0
    %720 = vmatpush.msra.mxu0 0.0
    %721 = vmatpush.msra.mxu0 0.0
    %722 = vmatpush.msra.mxu0 0.0
    %723 = vmatpush.msra.mxu0 0.0
    %724 = vmatpush.msra.mxu0 0.0
    %725 = vmatpush.msra.mxu0 0.0
    %726 = vmatpush.msra.mxu0 0.0
    %727 = vmatpush.msra.mxu0 %v69
    %728 = vmatpush.msra.mxu0 %v68
    %729 = vmatpush.msra.mxu0 %v67
    %730 = vmatpush.msra.mxu0 %v66
    %731 = vmatmul.f32.gmra.mxu0 %v713
    %v732 = vpop.f32.mrf.mxu0
    %v733 = vadd.f32 0.0, %v732
    %734 = vdwg.mxu0
    %v735 = vadd.f32 %v138, %v733
    %v736 = vmul.f32 %v735, 0.5
    %v737 = vtanh.pop %v736
    %v738 = vmul.f32 %v737, 0.5
    %v739 = vadd.f32 %v738, 0.5
    %v740 = vtanh.pop %v735
    %v741 = vmul.f32 %v739, %v636
    %743 = vrot.lane.b32.xlu0 %v740, 64
    %v744 = vpop.permute.xlu0 %743
    %v746 = vmul.f32 %v739, %v744
    %748 = vrot.lane.b32.xlu0 %v746, 32
    %v749 = vpop.permute.xlu0 %748
    %v751 = vadd.f32 %v741, %v749
    %v752 = vtanh.pop %v751
    %754 = vrot.lane.b32.xlu0 %v752, 64
    %v755 = vpop.permute.xlu0 %754
    %v757 = vmul.f32 %v739, %v755
    %759 = vrot.lane.b32.xlu0 %v757, 32
    %v760 = vpop.permute.xlu0 %759
    %763 = vrot.lane.b32.xlu0 %v712, 96
    %v764 = vpop.permute.xlu0 %763
    %v766 = vsel %vm116, %v760, %v764
    %v768 = vsel %vm191, %v766, 0
    %770 = vmatpush.msra.mxu0 0.0
    %771 = vmatpush.msra.mxu0 0.0
    %772 = vmatpush.msra.mxu0 0.0
    %773 = vmatpush.msra.mxu0 0.0
    %774 = vmatpush.msra.mxu0 %v92
    %775 = vmatpush.msra.mxu0 %v90
    %776 = vmatpush.msra.mxu0 %v88
    %777 = vmatpush.msra.mxu0 %v86
    %778 = vmatpush.msra.mxu0 %v84
    %779 = vmatpush.msra.mxu0 %v82
    %780 = vmatpush.msra.mxu0 %v80
    %781 = vmatpush.msra.mxu0 %v78
    %782 = vmatpush.msra.mxu0 %v76
    %783 = vmatpush.msra.mxu0 %v74
    %784 = vmatpush.msra.mxu0 %v72
    %785 = vmatpush.msra.mxu0 %v70
    %786 = vmatmul.f32.gmra.mxu0 %v768
    %v787 = vpop.f32.mrf.mxu0
    %v788 = vadd.f32 %v108, %v787
    %789 = vdwg.mxu0
    %790 = vmatpush.msra.mxu0 0.0
    %791 = vmatpush.msra.mxu0 0.0
    %792 = vmatpush.msra.mxu0 0.0
    %793 = vmatpush.msra.mxu0 0.0
    %794 = vmatpush.msra.mxu0 %v93
    %795 = vmatpush.msra.mxu0 %v91
    %796 = vmatpush.msra.mxu0 %v89
    %797 = vmatpush.msra.mxu0 %v87
    %798 = vmatpush.msra.mxu0 %v85
    %799 = vmatpush.msra.mxu0 %v83
    %800 = vmatpush.msra.mxu0 %v81
    %801 = vmatpush.msra.mxu0 %v79
    %802 = vmatpush.msra.mxu0 %v77
    %803 = vmatpush.msra.mxu0 %v75
    %804 = vmatpush.msra.mxu0 %v73
    %805 = vmatpush.msra.mxu0 %v71
    %806 = vmatmul.f32.gmra.mxu0 %v768
    %v807 = vpop.f32.mrf.mxu0
    %v808 = vadd.f32 %v109, %v807
    %809 = vdwg.mxu0
    %v810 = vmul.f32 %v788, 0.5
    %v811 = vtanh.pop %v810
    %v812 = vmul.f32 %v811, 0.5
    %v813 = vadd.f32 %v812, 0.5
    %v814 = vtanh.pop %v808
    %v815 = vmul.f32 %v808, 0.5
    %v816 = vtanh.pop %v815
    %v817 = vmul.f32 %v816, 0.5
    %v818 = vadd.f32 %v817, 0.5
    %v819 = vmul.f32 %v813, %v710
    %v820 = vmul.f32 %v813, %v814
    %822 = vrot.lane.b32.xlu0 %v820, 64
    %v823 = vpop.permute.xlu0 %822
    %v825 = vadd.f32 %v819, %v823
    %v826 = vtanh.pop %v825
    %v827 = vmul.f32 %v818, %v826
    %v828 = vsel %vm116, %v760, 0
    %830 = vmatpush.msra.mxu0 0.0
    %831 = vmatpush.msra.mxu0 0.0
    %832 = vmatpush.msra.mxu0 0.0
    %833 = vmatpush.msra.mxu0 0.0
    %834 = vmatpush.msra.mxu0 0.0
    %835 = vmatpush.msra.mxu0 0.0
    %836 = vmatpush.msra.mxu0 0.0
    %837 = vmatpush.msra.mxu0 0.0
    %838 = vmatpush.msra.mxu0 0.0
    %839 = vmatpush.msra.mxu0 0.0
    %840 = vmatpush.msra.mxu0 0.0
    %841 = vmatpush.msra.mxu0 0.0
    %842 = vmatpush.msra.mxu0 %v69
    %843 = vmatpush.msra.mxu0 %v68
    %844 = vmatpush.msra.mxu0 %v67
    %845 = vmatpush.msra.mxu0 %v66
    %846 = vmatmul.f32.gmra.mxu0 %v828
    %v847 = vpop.f32.mrf.mxu0
    %v848 = vadd.f32 0.0, %v847
    %849 = vdwg.mxu0
    %v850 = vadd.f32 %v138, %v848
    %v851 = vmul.f32 %v850, 0.5
    %v852 = vtanh.pop %v851
    %v853 = vmul.f32 %v852, 0.5
    %v854 = vadd.f32 %v853, 0.5
    %v855 = vtanh.pop %v850
    %v856 = vmul.f32 %v854, %v751
    %858 = vrot.lane.b32.xlu0 %v855, 64
    %v859 = vpop.permute.xlu0 %858
    %v861 = vmul.f32 %v854, %v859
    %863 = vrot.lane.b32.xlu0 %v861, 32
    %v864 = vpop.permute.xlu0 %863
    %v866 = vadd.f32 %v856, %v864
    %v867 = vtanh.pop %v866
    %869 = vrot.lane.b32.xlu0 %v867, 64
    %v870 = vpop.permute.xlu0 %869
    %v872 = vmul.f32 %v854, %v870
    %874 = vrot.lane.b32.xlu0 %v872, 32
    %v875 = vpop.permute.xlu0 %874
    %878 = vrot.lane.b32.xlu0 %v827, 96
    %v879 = vpop.permute.xlu0 %878
    %v881 = vsel %vm116, %v875, %v879
    %v883 = vsel %vm191, %v881, 0
    %885 = vmatpush.msra.mxu0 0.0
    %886 = vmatpush.msra.mxu0 0.0
    %887 = vmatpush.msra.mxu0 0.0
    %888 = vmatpush.msra.mxu0 0.0
    %889 = vmatpush.msra.mxu0 %v92
    %890 = vmatpush.msra.mxu0 %v90
    %891 = vmatpush.msra.mxu0 %v88
    %892 = vmatpush.msra.mxu0 %v86
    %893 = vmatpush.msra.mxu0 %v84
    %894 = vmatpush.msra.mxu0 %v82
    %895 = vmatpush.msra.mxu0 %v80
    %896 = vmatpush.msra.mxu0 %v78
    %897 = vmatpush.msra.mxu0 %v76
    %898 = vmatpush.msra.mxu0 %v74
    %899 = vmatpush.msra.mxu0 %v72
    %900 = vmatpush.msra.mxu0 %v70
    %901 = vmatmul.f32.gmra.mxu0 %v883
    %v902 = vpop.f32.mrf.mxu0
    %v903 = vadd.f32 %v108, %v902
    %904 = vdwg.mxu0
    %905 = vmatpush.msra.mxu0 0.0
    %906 = vmatpush.msra.mxu0 0.0
    %907 = vmatpush.msra.mxu0 0.0
    %908 = vmatpush.msra.mxu0 0.0
    %909 = vmatpush.msra.mxu0 %v93
    %910 = vmatpush.msra.mxu0 %v91
    %911 = vmatpush.msra.mxu0 %v89
    %912 = vmatpush.msra.mxu0 %v87
    %913 = vmatpush.msra.mxu0 %v85
    %914 = vmatpush.msra.mxu0 %v83
    %915 = vmatpush.msra.mxu0 %v81
    %916 = vmatpush.msra.mxu0 %v79
    %917 = vmatpush.msra.mxu0 %v77
    %918 = vmatpush.msra.mxu0 %v75
    %919 = vmatpush.msra.mxu0 %v73
    %920 = vmatpush.msra.mxu0 %v71
    %921 = vmatmul.f32.gmra.mxu0 %v883
    %v922 = vpop.f32.mrf.mxu0
    %v923 = vadd.f32 %v109, %v922
    %924 = vdwg.mxu0
    %v925 = vmul.f32 %v903, 0.5
    %v926 = vtanh.pop %v925
    %v927 = vmul.f32 %v926, 0.5
    %v928 = vadd.f32 %v927, 0.5
    %v929 = vtanh.pop %v923
    %v930 = vmul.f32 %v923, 0.5
    %v931 = vtanh.pop %v930
    %v932 = vmul.f32 %v931, 0.5
    %v933 = vadd.f32 %v932, 0.5
    %v934 = vmul.f32 %v928, %v825
    %v935 = vmul.f32 %v928, %v929
    %937 = vrot.lane.b32.xlu0 %v935, 64
    %v938 = vpop.permute.xlu0 %937
    %v940 = vadd.f32 %v934, %v938
    %v941 = vtanh.pop %v940
    %v942 = vmul.f32 %v933, %v941
    %v943 = vsel %vm116, %v875, 0
    %945 = vmatpush.msra.mxu0 0.0
    %946 = vmatpush.msra.mxu0 0.0
    %947 = vmatpush.msra.mxu0 0.0
    %948 = vmatpush.msra.mxu0 0.0
    %949 = vmatpush.msra.mxu0 0.0
    %950 = vmatpush.msra.mxu0 0.0
    %951 = vmatpush.msra.mxu0 0.0
    %952 = vmatpush.msra.mxu0 0.0
    %953 = vmatpush.msra.mxu0 0.0
    %954 = vmatpush.msra.mxu0 0.0
    %955 = vmatpush.msra.mxu0 0.0
    %956 = vmatpush.msra.mxu0 0.0
    %957 = vmatpush.msra.mxu0 %v69
    %958 = vmatpush.msra.mxu0 %v68
    %959 = vmatpush.msra.mxu0 %v67
    %960 = vmatpush.msra.mxu0 %v66
    %961 = vmatmul.f32.gmra.mxu0 %v943
    %v962 = vpop.f32.mrf.mxu0
    %v963 = vadd.f32 0.0, %v962
    %964 = vdwg.mxu0
    %v965 = vadd.f32 %v138, %v963
    %v966 = vmul.f32 %v965, 0.5
    %v967 = vtanh.pop %v966
    %v968 = vmul.f32 %v967, 0.5
    %v969 = vadd.f32 %v968, 0.5
    %v970 = vtanh.pop %v965
    %v971 = vmul.f32 %v969, %v866
    %973 = vrot.lane.b32.xlu0 %v970, 64
    %v974 = vpop.permute.xlu0 %973
    %v976 = vmul.f32 %v969, %v974
    %978 = vrot.lane.b32.xlu0 %v976, 32
    %v979 = vpop.permute.xlu0 %978
    %v981 = vadd.f32 %v971, %v979
    %v982 = vtanh.pop %v981
    %984 = vrot.lane.b32.xlu0 %v982, 64
    %v985 = vpop.permute.xlu0 %984
    %v987 = vmul.f32 %v969, %v985
    %989 = vrot.lane.b32.xlu0 %v987, 32
    %v990 = vpop.permute.xlu0 %989
    %993 = vrot.lane.b32.xlu0 %v942, 96
    %v994 = vpop.permute.xlu0 %993
    %v996 = vsel %vm116, %v990, %v994
    %v998 = vsel %vm191, %v996, 0
    %1000 = vmatpush.msra.mxu0 0.0
    %1001 = vmatpush.msra.mxu0 0.0
    %1002 = vmatpush.msra.mxu0 0.0
    %1003 = vmatpush.msra.mxu0 0.0
    %1004 = vmatpush.msra.mxu0 %v92
    %1005 = vmatpush.msra.mxu0 %v90
    %1006 = vmatpush.msra.mxu0 %v88
    %1007 = vmatpush.msra.mxu0 %v86
    %1008 = vmatpush.msra.mxu0 %v84
    %1009 = vmatpush.msra.mxu0 %v82
    %1010 = vmatpush.msra.mxu0 %v80
    %1011 = vmatpush.msra.mxu0 %v78
    %1012 = vmatpush.msra.mxu0 %v76
    %1013 = vmatpush.msra.mxu0 %v74
    %1014 = vmatpush.msra.mxu0 %v72
    %1015 = vmatpush.msra.mxu0 %v70
    %1016 = vmatmul.f32.gmra.mxu0 %v998
    %v1017 = vpop.f32.mrf.mxu0
    %v1018 = vadd.f32 %v108, %v1017
    %1019 = vdwg.mxu0
    %1020 = vmatpush.msra.mxu0 0.0
    %1021 = vmatpush.msra.mxu0 0.0
    %1022 = vmatpush.msra.mxu0 0.0
    %1023 = vmatpush.msra.mxu0 0.0
    %1024 = vmatpush.msra.mxu0 %v93
    %1025 = vmatpush.msra.mxu0 %v91
    %1026 = vmatpush.msra.mxu0 %v89
    %1027 = vmatpush.msra.mxu0 %v87
    %1028 = vmatpush.msra.mxu0 %v85
    %1029 = vmatpush.msra.mxu0 %v83
    %1030 = vmatpush.msra.mxu0 %v81
    %1031 = vmatpush.msra.mxu0 %v79
    %1032 = vmatpush.msra.mxu0 %v77
    %1033 = vmatpush.msra.mxu0 %v75
    %1034 = vmatpush.msra.mxu0 %v73
    %1035 = vmatpush.msra.mxu0 %v71
    %1036 = vmatmul.f32.gmra.mxu0 %v998
    %v1037 = vpop.f32.mrf.mxu0
    %v1038 = vadd.f32 %v109, %v1037
    %1039 = vdwg.mxu0
    %v1040 = vmul.f32 %v1018, 0.5
    %v1041 = vtanh.pop %v1040
    %v1042 = vmul.f32 %v1041, 0.5
    %v1043 = vadd.f32 %v1042, 0.5
    %v1044 = vtanh.pop %v1038
    %v1045 = vmul.f32 %v1038, 0.5
    %v1046 = vtanh.pop %v1045
    %v1047 = vmul.f32 %v1046, 0.5
    %v1048 = vadd.f32 %v1047, 0.5
    %v1049 = vmul.f32 %v1043, %v940
    %v1050 = vmul.f32 %v1043, %v1044
    %1052 = vrot.lane.b32.xlu0 %v1050, 64
    %v1053 = vpop.permute.xlu0 %1052
    %v1055 = vadd.f32 %v1049, %v1053
    %v1056 = vtanh.pop %v1055
    %v1057 = vmul.f32 %v1048, %v1056
    %v1058 = vrot.slane %v367, 6
    %v1060 = vrot.slane %v482, 4
    %v1062 = vrot.slane %v597, 2
    %v1064 = vrot.slane %v827, 6
    %v1066 = vrot.slane %v942, 4
    %v1069 = vrot.slane %v1057, 2
    %vm1071 = vcmask 1041408
    %v1072 = vsel %vm1071, %v252, %v1058
    %vm1073 = vcmask 1043456
    %v1074 = vsel %vm1073, %v1072, %v1060
    %vm1075 = vcmask 1045504
    %v1076 = vsel %vm1075, %v1074, %v1062
    %v1077 = vsel %vm1071, %v712, %v1064
    %v1078 = vsel %vm1073, %v1077, %v1066
    %v1079 = vsel %vm1075, %v1078, %v1069
    %1082 = vrot.lane.b32.xlu0 %v1076, 64
    %v1083 = vpop.permute.xlu0 %1082
    %1084 = vrot.lane.b32.xlu0 %v1079, 64
    %v1085 = vpop.permute.xlu0 %1084
    %vm1086 = vcmask 523264
    %v1087 = vsel %vm1086, %v1083, 0
    %v1089 = vsel %vm1086, %v1085, 0
    %1091 = vmatpush.msra.mxu0 0.0
    %1092 = vmatpush.msra.mxu0 0.0
    %1093 = vmatpush.msra.mxu0 0.0
    %1094 = vmatpush.msra.mxu0 0.0
    %1095 = vmatpush.msra.mxu0 0.0
    %1096 = vmatpush.msra.mxu0 0.0
    %1097 = vmatpush.msra.mxu0 0.0
    %1098 = vmatpush.msra.mxu0 0.0
    %1099 = vmatpush.msra.mxu0 %v101
    %1100 = vmatpush.msra.mxu0 %v100
    %1101 = vmatpush.msra.mxu0 %v99
    %1102 = vmatpush.msra.mxu0 %v98
    %1103 = vmatpush.msra.mxu0 %v97
    %1104 = vmatpush.msra.mxu0 %v96
    %1105 = vmatpush.msra.mxu0 %v95
    %1106 = vmatpush.msra.mxu0 %v94
    %1107 = vmatmul.f32.gmra.mxu0 %v1087
    %v1108 = vpop.f32.mrf.mxu0
    %v1109 = vadd.f32 %v114, %v1108
    %1110 = vmatmul.f32.gmra.mxu0 %v1089
    %v1111 = vpop.f32.mrf.mxu0
    %v1112 = vadd.f32 %v114, %v1111
    %1113 = vdwg.mxu0
    %vm1114 = vcmask 7168
    %1115 = vst.msk [vmem:[%s8] sm:$0xff] %vm1114, %v1109
    %1116 = vst.msk [vmem:[%s8 + $0x8] sm:$0xff] %vm1114, %v1112
    // Predicated region
    $region42: #{tpu_custom_call.1} parent=1 // pred_check
      _
    $region43: #{tpu_custom_call.1} parent=1 // pred_check_branch
      %1118 = sbr.rel (0) target = $region45
    $region44: #{tpu_custom_call.1} parent=1 // pred_region
      _
    $region45: #{tpu_custom_call.1} parent=1 // pred_fallthru
      _
    // Predicated region
    $region46: #{tpu_custom_call.1} parent=1 // pred_check
      _
    $region47: #{tpu_custom_call.1} parent=1 // pred_check_branch
      %1120 = sbr.rel (0) target = $region49
    $region48: #{tpu_custom_call.1} parent=1 // pred_region
      _
    $region49: #{tpu_custom_call.1} parent=1 // pred_fallthru
      _
    %1121 = vsyncpa [#allocation4], 1
    %1122 = vsyncpa [#allocation6], 1

</llo_original>
